<compile_context>
chip_gen: v7x
topology: tpu7x:2x2x1
jax: 0.10.0
libtpu: 0.0.40
codegen_flags: <defaults>
</compile_context>

<pallas_src>
import functools
import math

import jax
import jax.numpy as jnp
from jax import lax
from jax.experimental import pallas as pl
from jax.experimental.pallas import tpu as pltpu


def _round_up(x, m):
    return ((x + m - 1) // m) * m


def _intra_metapath_mean_kernel(idx_ref, node_ref, out_ref, acc_ref, *,
                                path_len, node_tile):
    """One (edge-tile, node-tile) grid step of the fused gather + mean.

    idx_ref : (TE, L)  int32   metapath node indices for this edge tile
    idx_ref : values must be in-range node ids (padded node rows are zeros)
    node_ref: (TN, H)  native  node-feature tile (bf16 or f32)
    out_ref : (TE, H)  native  mean-aggregated features (written on last j)
    acc_ref : (TE, H)  f32     VMEM accumulator across node tiles
    """
    j = pl.program_id(1)

    @pl.when(j == 0)
    def _init():
        acc_ref[...] = jnp.zeros_like(acc_ref)

    idx = idx_ref[...]                                    # (TE, L)
    node = node_ref[...]                                  # (TN, H)
    te = idx.shape[0]
    tn = node.shape[0]

    # Global node-id iota along lanes for this node tile.
    iota = lax.broadcasted_iota(jnp.int32, (te, tn), 1) + j * node_tile

    # Fused selector: occurrence count of each node id per metapath (exact
    # small integers, VPU only). One selector replaces path_len separate
    # one-hot matmuls.
    counts = (idx[:, 0:1] == iota).astype(jnp.int32)
    for l in range(1, path_len):                          # short static loop
        counts = counts + (idx[:, l:l + 1] == iota).astype(jnp.int32)

    # Single MXU matmul per grid step; counts are exact in bf16 (<= path_len),
    # accumulation is exact in f32 regardless of the node-table dtype.
    acc_ref[...] += jnp.dot(counts.astype(node.dtype), node,
                            preferred_element_type=jnp.float32)

    @pl.when(j == pl.num_programs(1) - 1)
    def _finalize():
        # 1/path_len applied once on the f32 accumulator (cheaper and more
        # exact than folding the scale into the narrow-dtype selector).
        out_ref[...] = (acc_ref[...] * (1.0 / path_len)).astype(out_ref.dtype)


def _vmem_limit_bytes():
    """Generation-aware VMEM budget: ~56 MiB on v7x, ~100 MiB on v5e/v6e."""
    cap = 64 * 1024 * 1024  # conservative fallback (v7x per-TC VMEM)
    try:
        cap = int(pltpu.get_tpu_info().vmem_capacity_bytes)
    except Exception:
        pass
    return int(min(max(cap - 8 * 1024 * 1024, 32 * 1024 * 1024),
                   100 * 1024 * 1024))


def intra_metapath_aggregate(node_features, metapath_idx, *, num_head=1,
                             edge_tile=512):
    """Fused F.embedding + mean(dim=1) + per-head replication -> (E, num_head, H).

    node_features: (N, H) float — kept in its native dtype (bf16 recommended).
    metapath_idx : (E, L) int   — in-range indices into node_features.
    """
    metapath_idx = metapath_idx.astype(jnp.int32)
    n, h = node_features.shape
    e, path_len = metapath_idx.shape
    out_dtype = node_features.dtype

    # Node (contraction) axis: pad to a multiple of 256 so the MXU sees full
    # 256x256 passes (padded zero rows are never selected, result unchanged).
    n_pad = _round_up(max(n, 1), 256)
    if n_pad != n:
        node_features = jnp.pad(node_features, ((0, n_pad - n), (0, 0)))
    node_tile = math.gcd(n_pad, 512)              # 256 or 512, divides n_pad
    num_node_tiles = n_pad // node_tile

    # Edge axis: large tiles amortize the ~0.35 us per-grid-step overhead, but
    # keep >= 2 tiles when possible so v7x's two TensorCores both get work.
    edge_tile = _round_up(max(8, min(edge_tile, 1024)), 8)
    edge_tile = min(edge_tile, _round_up(e, 8))
    if e > 8:
        edge_tile = min(edge_tile, _round_up(-(-e // 2), 8))
    edge_tile = max(edge_tile, 8)
    e_pad = _round_up(e, edge_tile)
    if e_pad != e:
        metapath_idx = jnp.pad(metapath_idx, ((0, e_pad - e), (0, 0)))
    num_edge_tiles = e_pad // edge_tile

    kernel = functools.partial(_intra_metapath_mean_kernel,
                               path_len=path_len, node_tile=node_tile)

    def build(single_buffer_node):
        if single_buffer_node:
            # Constant block index -> double-buffering the whole table would
            # only double its VMEM footprint (matters most on v7x's 64 MiB).
            node_spec = pl.BlockSpec((node_tile, h), lambda i, j: (j, 0),
                                     pipeline_mode=pl.Buffered(1))
        else:
            node_spec = pl.BlockSpec((node_tile, h), lambda i, j: (j, 0))
        return pl.pallas_call(
            kernel,
            out_shape=jax.ShapeDtypeStruct((e_pad, h), out_dtype),
            grid_spec=pltpu.PrefetchScalarGridSpec(
                num_scalar_prefetch=0,
                grid=(num_edge_tiles, num_node_tiles),
                in_specs=[
                    # Metapath indices: tile over edges, full (short) path len.
                    pl.BlockSpec((edge_tile, path_len), lambda i, j: (i, 0)),
                    node_spec,
                ],
                out_specs=pl.BlockSpec((edge_tile, h), lambda i, j: (i, 0)),
                scratch_shapes=[pltpu.VMEM((edge_tile, h), jnp.float32)],
            ),
            compiler_params=pltpu.CompilerParams(
                dimension_semantics=("parallel", "arbitrary"),
                vmem_limit_bytes=_vmem_limit_bytes(),
            ),
        )

    try:
        out2d = build(single_buffer_node=(num_node_tiles == 1))(
            metapath_idx, node_features)
    except Exception:
        # Fallback in case this JAX build rejects pl.Buffered(1).
        out2d = build(single_buffer_node=False)(metapath_idx, node_features)

    # concat([mean]*num_head, -1).view(-1, num_head, H) == per-head broadcast;
    # done outside the kernel so the HBM writeback is not num_head x larger.
    mean = out2d[:e]
    return jnp.broadcast_to(mean[:, None, :], (e, num_head, h))


class IntraMetaPathAggregator:
    """JAX/Pallas mirror of the PyTorch module (mean aggregator only)."""

    def __init__(self, hidden_size, num_head=1, aggregator_type='mean',
                 activation=None):
        if aggregator_type != 'mean':
            # TODO(synk): aggregator_type='GRU' (torch.nn.GRU) not implemented.
            raise ValueError("only aggregator_type='mean' is supported here")
        self.hidden_size = hidden_size
        self.num_head = num_head
        self.activation = activation  # consumed by the (external) attention

    def forward(self, node_features, edge_index, metapath_idx):
        agg_feat = intra_metapath_aggregate(
            node_features, metapath_idx, num_head=self.num_head)
        # TODO(synk): MultiHeadEdgeAttention(x, edge_index, edge_attr=agg_feat)
        # is not defined in the provided spec; return its edge_attr input.
        del edge_index
        return agg_feat


if __name__ == "__main__":
    key = jax.random.PRNGKey(0)
    k_feat, k_idx, k_edge = jax.random.split(key, 3)

    num_nodes = 64
    hidden = 128          # lane-aligned hidden width
    num_paths = 256       # metapath instances (edges)
    path_len = 4          # metapath length
    num_head = 2

    node_features = jax.random.normal(k_feat, (num_nodes, hidden), jnp.float32)
    metapath_idx = jax.random.randint(k_idx, (num_paths, path_len), 0, num_nodes,
                                      dtype=jnp.int32)
    edge_index = jax.random.randint(k_edge, (2, num_paths), 0, num_nodes,
                                    dtype=jnp.int32)  # unused (attention external)

    model = IntraMetaPathAggregator(hidden_size=hidden, num_head=num_head)

    # f32 node table: result is exact (f32 accumulation, exact selector).
    out = jax.block_until_ready(
        model.forward(node_features, edge_index, metapath_idx))

    ref_mean = node_features[metapath_idx].mean(axis=1)                  # (E, H)
    ref = jnp.broadcast_to(ref_mean[:, None, :], (num_paths, num_head, hidden))

    assert out.shape == (num_paths, num_head, hidden)
    assert out.dtype == node_features.dtype
    assert bool(jnp.allclose(out, ref, atol=1e-5, rtol=1e-5))

    # bf16 node table: MXU-native path (selector counts stay exact; only node
    # values are rounded to bf16).
    out_bf16 = jax.block_until_ready(
        model.forward(node_features.astype(jnp.bfloat16), edge_index,
                      metapath_idx))
    assert out_bf16.dtype == jnp.bfloat16
    assert bool(jnp.allclose(out_bf16.astype(jnp.float32), ref,
                             atol=5e-2, rtol=5e-2))

    print("KERNEL_OK")
</pallas_src>

<mosaic_0001>
module attributes {stable_mosaic.version = 11 : i64} {
  func.func @_intra_metapath_mean_kernel(%arg0: i32, %arg1: i32, %arg2: memref<128x4xi32, #tpu.memory_space<vmem>>, %arg3: memref<256x128xf32, #tpu.memory_space<vmem>>, %arg4: memref<128x128xf32, #tpu.memory_space<vmem>>, %arg5: memref<128x128xf32, #tpu.memory_space<vmem>>) attributes {dimension_semantics = [#tpu.dimension_semantics<parallel>, #tpu.dimension_semantics<arbitrary>], iteration_bounds = array<i64: 2, 1>, scalar_prefetch = 0 : i64, scratch_operands = 1 : i64, tpu.core_type = #tpu.core_type<tc>, window_params = [{transform_indices = @transform_0, window_bounds = array<i64: 128, 4>}, {pipeline_mode = #tpu.pipeline_mode<synchronous>, transform_indices = @transform_1, window_bounds = array<i64: 256, 128>}, {transform_indices = @transform_2, window_bounds = array<i64: 128, 128>}]} {
    %c0_i32 = arith.constant 0 : i32
    %0 = arith.cmpi eq, %arg1, %c0_i32 : i32
    %1 = arith.extui %0 : i1 to i32
    %c0_i32_0 = arith.constant 0 : i32
    %2 = arith.cmpi ne, %1, %c0_i32_0 : i32
    scf.if %2 {
      %cst_10 = arith.constant 0.000000e+00 : f32
      %36 = vector.broadcast %cst_10 : f32 to vector<128x128xf32>
      %c0_11 = arith.constant 0 : index
      %c0_12 = arith.constant 0 : index
      %37 = vector.load %arg5[%c0_11, %c0_12] : memref<128x128xf32, #tpu.memory_space<vmem>>, vector<128x128xf32>
      tpu.vector_store %arg5[%c0_11, %c0_12], %36 {strides = array<i32>} : memref<128x128xf32, #tpu.memory_space<vmem>>, vector<128x128xf32>,
    } else {
    }
    %c0 = arith.constant 0 : index
    %c0_1 = arith.constant 0 : index
    %3 = vector.load %arg2[%c0, %c0_1] : memref<128x4xi32, #tpu.memory_space<vmem>>, vector<128x4xi32>
    %c0_2 = arith.constant 0 : index
    %c0_3 = arith.constant 0 : index
    %4 = vector.load %arg3[%c0_2, %c0_3] : memref<256x128xf32, #tpu.memory_space<vmem>>, vector<256x128xf32>
    %5 = tpu.iota {dimensions = array<i32: 1>} : vector<128x256xi32>
    %c256_i32 = arith.constant 256 : i32
    %6 = arith.muli %arg1, %c256_i32 : i32
    %7 = vector.broadcast %6 : i32 to vector<128x256xi32>
    %8 = arith.addi %5, %7 : vector<128x256xi32>
    %9 = vector.extract_strided_slice %3 {offsets = [0, 0], sizes = [128, 1], strides = [1, 1]} : vector<128x4xi32> to vector<128x1xi32>
    %10 = vector.broadcast %9 : vector<128x1xi32> to vector<128x256xi32>
    %11 = arith.cmpi eq, %10, %8 : vector<128x256xi32>
    %12 = arith.extui %11 : vector<128x256xi1> to vector<128x256xi32>
    %13 = vector.extract_strided_slice %3 {offsets = [0, 1], sizes = [128, 1], strides = [1, 1]} : vector<128x4xi32> to vector<128x1xi32>
    %14 = vector.broadcast %13 : vector<128x1xi32> to vector<128x256xi32>
    %15 = arith.cmpi eq, %14, %8 : vector<128x256xi32>
    %16 = arith.extui %15 : vector<128x256xi1> to vector<128x256xi32>
    %17 = arith.addi %12, %16 : vector<128x256xi32>
    %18 = vector.extract_strided_slice %3 {offsets = [0, 2], sizes = [128, 1], strides = [1, 1]} : vector<128x4xi32> to vector<128x1xi32>
    %19 = vector.broadcast %18 : vector<128x1xi32> to vector<128x256xi32>
    %20 = arith.cmpi eq, %19, %8 : vector<128x256xi32>
    %21 = arith.extui %20 : vector<128x256xi1> to vector<128x256xi32>
    %22 = arith.addi %17, %21 : vector<128x256xi32>
    %23 = vector.extract_strided_slice %3 {offsets = [0, 3], sizes = [128, 1], strides = [1, 1]} : vector<128x4xi32> to vector<128x1xi32>
    %24 = vector.broadcast %23 : vector<128x1xi32> to vector<128x256xi32>
    %25 = arith.cmpi eq, %24, %8 : vector<128x256xi32>
    %26 = arith.extui %25 : vector<128x256xi1> to vector<128x256xi32>
    %27 = arith.addi %22, %26 : vector<128x256xi32>
    %c0_4 = arith.constant 0 : index
    %c0_5 = arith.constant 0 : index
    %28 = vector.load %arg5[%c0_4, %c0_5] : memref<128x128xf32, #tpu.memory_space<vmem>>, vector<128x128xf32>
    %29 = arith.sitofp %27 : vector<128x256xi32> to vector<128x256xf32>
    %cst = arith.constant dense<0.000000e+00> : vector<128x128xf32>
    %30 = tpu.matmul %29, %4, %cst {dimension_numbers = #tpu.dot_dimension_numbers<[1], [0], [0], [1], [0, 0, 1, 1], [], []>} : vector<128x256xf32>, vector<256x128xf32>, vector<128x128xf32> -> vector<128x128xf32>
    %31 = arith.addf %28, %30 : vector<128x128xf32>
    %c0_6 = arith.constant 0 : index
    %c0_7 = arith.constant 0 : index
    %32 = vector.load %arg5[%c0_6, %c0_7] : memref<128x128xf32, #tpu.memory_space<vmem>>, vector<128x128xf32>
    tpu.vector_store %arg5[%c0_6, %c0_7], %31 {strides = array<i32>} : memref<128x128xf32, #tpu.memory_space<vmem>>, vector<128x128xf32>,
    %c0_i32_8 = arith.constant 0 : i32
    %33 = arith.cmpi eq, %arg1, %c0_i32_8 : i32
    %34 = arith.extui %33 : i1 to i32
    %c0_i32_9 = arith.constant 0 : i32
    %35 = arith.cmpi ne, %34, %c0_i32_9 : i32
    scf.if %35 {
      %c0_10 = arith.constant 0 : index
      %c0_11 = arith.constant 0 : index
      %36 = vector.load %arg5[%c0_10, %c0_11] : memref<128x128xf32, #tpu.memory_space<vmem>>, vector<128x128xf32>
      %cst_12 = arith.constant 2.500000e-01 : f32
      %37 = vector.broadcast %cst_12 : f32 to vector<128x128xf32>
      %38 = arith.mulf %36, %37 : vector<128x128xf32>
      %c0_13 = arith.constant 0 : index
      %c0_14 = arith.constant 0 : index
      %39 = vector.load %arg4[%c0_13, %c0_14] : memref<128x128xf32, #tpu.memory_space<vmem>>, vector<128x128xf32>
      tpu.vector_store %arg4[%c0_13, %c0_14], %38 {strides = array<i32>} : memref<128x128xf32, #tpu.memory_space<vmem>>, vector<128x128xf32>,
    } else {
    }
    return
  }
  func.func @transform_0(%arg0: i32, %arg1: i32) -> (i32, i32) {
    %c0_i32 = arith.constant 0 : i32
    %c0_i32_0 = arith.constant 0 : i32
    return %arg0, %c0_i32 : i32, i32
  }
  func.func @transform_1(%arg0: i32, %arg1: i32) -> (i32, i32) {
    %c0_i32 = arith.constant 0 : i32
    %c0_i32_0 = arith.constant 0 : i32
    return %arg1, %c0_i32 : i32, i32
  }
  func.func @transform_2(%arg0: i32, %arg1: i32) -> (i32, i32) {
    %c0_i32 = arith.constant 0 : i32
    %c0_i32_0 = arith.constant 0 : i32
    return %arg0, %c0_i32 : i32, i32
  }
}

module attributes {stable_mosaic.version = 11 : i64} {
  func.func @_intra_metapath_mean_kernel(%arg0: i32, %arg1: i32, %arg2: memref<128x4xi32, #tpu.memory_space<vmem>>, %arg3: memref<256x128xf32, #tpu.memory_space<vmem>>, %arg4: memref<128x128xf32, #tpu.memory_space<vmem>>, %arg5: memref<128x128xf32, #tpu.memory_space<vmem>>) attributes {dimension_semantics = [#tpu.dimension_semantics<parallel>, #tpu.dimension_semantics<arbitrary>], iteration_bounds = array<i64: 2, 1>, scalar_prefetch = 0 : i64, scratch_operands = 1 : i64, tpu.core_type = #tpu.core_type<tc>, window_params = [{transform_indices = @transform_0, window_bounds = array<i64: 128, 4>}, {transform_indices = @transform_1, window_bounds = array<i64: 256, 128>}, {transform_indices = @transform_2, window_bounds = array<i64: 128, 128>}]} {
    %c0_i32 = arith.constant 0 : i32
    %0 = arith.cmpi eq, %arg1, %c0_i32 : i32
    %1 = arith.extui %0 : i1 to i32
    %c0_i32_0 = arith.constant 0 : i32
    %2 = arith.cmpi ne, %1, %c0_i32_0 : i32
    scf.if %2 {
      %cst_10 = arith.constant 0.000000e+00 : f32
      %36 = vector.broadcast %cst_10 : f32 to vector<128x128xf32>
      %c0_11 = arith.constant 0 : index
      %c0_12 = arith.constant 0 : index
      %37 = vector.load %arg5[%c0_11, %c0_12] : memref<128x128xf32, #tpu.memory_space<vmem>>, vector<128x128xf32>
      tpu.vector_store %arg5[%c0_11, %c0_12], %36 {strides = array<i32>} : memref<128x128xf32, #tpu.memory_space<vmem>>, vector<128x128xf32>,
    } else {
    }
    %c0 = arith.constant 0 : index
    %c0_1 = arith.constant 0 : index
    %3 = vector.load %arg2[%c0, %c0_1] : memref<128x4xi32, #tpu.memory_space<vmem>>, vector<128x4xi32>
    %c0_2 = arith.constant 0 : index
    %c0_3 = arith.constant 0 : index
    %4 = vector.load %arg3[%c0_2, %c0_3] : memref<256x128xf32, #tpu.memory_space<vmem>>, vector<256x128xf32>
    %5 = tpu.iota {dimensions = array<i32: 1>} : vector<128x256xi32>
    %c256_i32 = arith.constant 256 : i32
    %6 = arith.muli %arg1, %c256_i32 : i32
    %7 = vector.broadcast %6 : i32 to vector<128x256xi32>
    %8 = arith.addi %5, %7 : vector<128x256xi32>
    %9 = vector.extract_strided_slice %3 {offsets = [0, 0], sizes = [128, 1], strides = [1, 1]} : vector<128x4xi32> to vector<128x1xi32>
    %10 = vector.broadcast %9 : vector<128x1xi32> to vector<128x256xi32>
    %11 = arith.cmpi eq, %10, %8 : vector<128x256xi32>
    %12 = arith.extui %11 : vector<128x256xi1> to vector<128x256xi32>
    %13 = vector.extract_strided_slice %3 {offsets = [0, 1], sizes = [128, 1], strides = [1, 1]} : vector<128x4xi32> to vector<128x1xi32>
    %14 = vector.broadcast %13 : vector<128x1xi32> to vector<128x256xi32>
    %15 = arith.cmpi eq, %14, %8 : vector<128x256xi32>
    %16 = arith.extui %15 : vector<128x256xi1> to vector<128x256xi32>
    %17 = arith.addi %12, %16 : vector<128x256xi32>
    %18 = vector.extract_strided_slice %3 {offsets = [0, 2], sizes = [128, 1], strides = [1, 1]} : vector<128x4xi32> to vector<128x1xi32>
    %19 = vector.broadcast %18 : vector<128x1xi32> to vector<128x256xi32>
    %20 = arith.cmpi eq, %19, %8 : vector<128x256xi32>
    %21 = arith.extui %20 : vector<128x256xi1> to vector<128x256xi32>
    %22 = arith.addi %17, %21 : vector<128x256xi32>
    %23 = vector.extract_strided_slice %3 {offsets = [0, 3], sizes = [128, 1], strides = [1, 1]} : vector<128x4xi32> to vector<128x1xi32>
    %24 = vector.broadcast %23 : vector<128x1xi32> to vector<128x256xi32>
    %25 = arith.cmpi eq, %24, %8 : vector<128x256xi32>
    %26 = arith.extui %25 : vector<128x256xi1> to vector<128x256xi32>
    %27 = arith.addi %22, %26 : vector<128x256xi32>
    %c0_4 = arith.constant 0 : index
    %c0_5 = arith.constant 0 : index
    %28 = vector.load %arg5[%c0_4, %c0_5] : memref<128x128xf32, #tpu.memory_space<vmem>>, vector<128x128xf32>
    %29 = arith.sitofp %27 : vector<128x256xi32> to vector<128x256xf32>
    %cst = arith.constant dense<0.000000e+00> : vector<128x128xf32>
    %30 = tpu.matmul %29, %4, %cst {dimension_numbers = #tpu.dot_dimension_numbers<[1], [0], [0], [1], [0, 0, 1, 1], [], []>} : vector<128x256xf32>, vector<256x128xf32>, vector<128x128xf32> -> vector<128x128xf32>
    %31 = arith.addf %28, %30 : vector<128x128xf32>
    %c0_6 = arith.constant 0 : index
    %c0_7 = arith.constant 0 : index
    %32 = vector.load %arg5[%c0_6, %c0_7] : memref<128x128xf32, #tpu.memory_space<vmem>>, vector<128x128xf32>
    tpu.vector_store %arg5[%c0_6, %c0_7], %31 {strides = array<i32>} : memref<128x128xf32, #tpu.memory_space<vmem>>, vector<128x128xf32>,
    %c0_i32_8 = arith.constant 0 : i32
    %33 = arith.cmpi eq, %arg1, %c0_i32_8 : i32
    %34 = arith.extui %33 : i1 to i32
    %c0_i32_9 = arith.constant 0 : i32
    %35 = arith.cmpi ne, %34, %c0_i32_9 : i32
    scf.if %35 {
      %c0_10 = arith.constant 0 : index
      %c0_11 = arith.constant 0 : index
      %36 = vector.load %arg5[%c0_10, %c0_11] : memref<128x128xf32, #tpu.memory_space<vmem>>, vector<128x128xf32>
      %cst_12 = arith.constant 2.500000e-01 : f32
      %37 = vector.broadcast %cst_12 : f32 to vector<128x128xf32>
      %38 = arith.mulf %36, %37 : vector<128x128xf32>
      %c0_13 = arith.constant 0 : index
      %c0_14 = arith.constant 0 : index
      %39 = vector.load %arg4[%c0_13, %c0_14] : memref<128x128xf32, #tpu.memory_space<vmem>>, vector<128x128xf32>
      tpu.vector_store %arg4[%c0_13, %c0_14], %38 {strides = array<i32>} : memref<128x128xf32, #tpu.memory_space<vmem>>, vector<128x128xf32>,
    } else {
    }
    return
  }
  func.func @transform_0(%arg0: i32, %arg1: i32) -> (i32, i32) {
    %c0_i32 = arith.constant 0 : i32
    %c0_i32_0 = arith.constant 0 : i32
    return %arg0, %c0_i32 : i32, i32
  }
  func.func @transform_1(%arg0: i32, %arg1: i32) -> (i32, i32) {
    %c0_i32 = arith.constant 0 : i32
    %c0_i32_0 = arith.constant 0 : i32
    return %arg1, %c0_i32 : i32, i32
  }
  func.func @transform_2(%arg0: i32, %arg1: i32) -> (i32, i32) {
    %c0_i32 = arith.constant 0 : i32
    %c0_i32_0 = arith.constant 0 : i32
    return %arg0, %c0_i32 : i32, i32
  }
}

</mosaic_0001>

<llo_original>
// kernel: tpu_custom_call.1
$region0: #{tpu_custom_call.1}
  #allocation0 [shape = 'u32[]', space=smem, size = 0x4, offset = 0x4, fixed_abs, tag = 'smem constant byte address 0x4 - core index']
  #allocation1 [shape = 'u32[144,128]{1,0:T(1,128)}', space=vmem, size = 0x12000, scoped, tag = 'internal scratch']
  #allocation2 [shape = 'f32[128,128]{1,0:T(8,128)}', space=vmem, size = 0x10000, scoped, tag = 'scratch operand']
  %s0 = inlined_call_operand.vmem [shape: s32[256,4], index: 0, kind: input, shape index: {}]
  %s1 = inlined_call_operand.vmem [shape: f32[256,128], index: 1, kind: input, shape index: {}]
  %s2 = inlined_call_operand.hbm [shape: f32[256,128], index: 2, kind: output, shape index: {}]
  %s3 = sld [smem:[#allocation0]]
  $region49: #{tpu_custom_call.1} parent=0
    _
  %s5 = ssub.s32 1, %s3
  %s6 = scalar_select 0, %s5, %s3
  $region1: #{tpu_custom_call.1} parent=0
    #allocation3 [shape = 'u8[131072]{0}', space=vmem, size = 0x20000, scoped, tag = 'output window, operand 0']
    #allocation4 [shape = 's32[2]{0}', space=sflag, size = 0x8, scoped, tag = 'scoped memory for tpu_custom_call.1']
    %7 = vsyncpa [#allocation4], 0
    %s8 = scalar_lea.sflag [#allocation4], 1
    %9 = vsyncpa %s8, 0
    loop: start=0, step=1, limit=4
    $region2: #{tpu_custom_call.1} parent=1 // loop_pre_header
      _
    $region3: #{tpu_custom_call.1} parent=1 // loop_header
      %s11 = sphi 0, %s15
      %p12 = scmp.ge.s32.totalorder %s11, 4
      %s18 = sphi 0, %s30
      %s19 = sphi 0, %s26
      %s20 = sphi 0, %s18
      %s21 = sphi 0, %s19
      %s22 = sphi 0, %s20
      %s23 = sphi 0, %s21
      %s33 = sphi 0, %s35
      %s36 = sphi 0, %s33
      %s37 = sphi 0, %s36
      %s53 = sphi 0, %s37
      %s59 = sphi 0, %s61
      %s62 = sphi 0, %s59
      %s63 = sphi 0, %s62
      %s79 = sphi 0, %s63
      %s85 = sphi 0, %s87
      %s88 = sphi 0, %s85
      %s89 = sphi 0, %s88
      %s105 = sphi 0, %s89
    $region4: #{tpu_custom_call.1} parent=1 // loop_header_branch
      %14 = sbr.rel (%p12) target = $region8
    $region5: #{tpu_custom_call.1} parent=1 // loop_body
      %s16 = ssub.s32 %s11, 1
      %s17 = ssub.s32 %s11, 2
      %s24 = sadd.s32 1, %s19
      %p25 = scmp.ge.s32.totalorder %s24, 1
      %s26 = scalar_select %p25, 0, %s24
      %s27 = sadd.s32 1, %s18
      %s28 = scalar_select %p25, %s27, %s18
      %p29 = scmp.ge.s32.totalorder %s28, 2
      %s30 = scalar_select %p29, 0, %s28
      %s31 = ssub.s32 %s18, %s30
      %p32 = scmp.eq.s32.totalorder %s31, 0
      %s34 = sadd.s32 %s33, 1
      %s35 = scalar_select %p32, %s33, %s34
      %p38 = pneg %p32
      %p39 = scmp.eq.s32.totalorder %s11, 1
      %p40 = por %p38, %p39
      %p41 = scmp.ne.s32.totalorder %s33, %s36
      %p42 = scmp.eq.s32.totalorder %s11, 0
      %p43 = por %p41, %p42
      %p44 = scmp.ne.s32.totalorder %s33, %s36
      %p45 = scmp.eq.s32.totalorder %s16, 1
      %p46 = por %p44, %p45
      %p47 = scmp.ne.s32.totalorder %s36, %s37
      %p48 = scmp.eq.s32.totalorder %s16, 0
      %p49 = por %p47, %p48
      %p50 = scmp.ne.s32.totalorder %s36, %s37
      %p51 = scmp.eq.s32.totalorder %s17, 1
      %p52 = por %p50, %p51
      %p54 = scmp.ne.s32.totalorder %s37, %s53
      %p55 = scmp.eq.s32.totalorder %s17, 0
      %p56 = por %p54, %p55
      %s57 = ssub.s32 %s19, %s26
      %p58 = scmp.eq.s32.totalorder %s57, 0
      %s60 = sadd.s32 %s59, 1
      %s61 = scalar_select %p58, %s59, %s60
      %p64 = pneg %p58
      %p65 = scmp.eq.s32.totalorder %s11, 1
      %p66 = por %p64, %p65
      %p67 = scmp.ne.s32.totalorder %s59, %s62
      %p68 = scmp.eq.s32.totalorder %s11, 0
      %p69 = por %p67, %p68
      %p70 = scmp.ne.s32.totalorder %s59, %s62
      %p71 = scmp.eq.s32.totalorder %s16, 1
      %p72 = por %p70, %p71
      %p73 = scmp.ne.s32.totalorder %s62, %s63
      %p74 = scmp.eq.s32.totalorder %s16, 0
      %p75 = por %p73, %p74
      %p76 = scmp.ne.s32.totalorder %s62, %s63
      %p77 = scmp.eq.s32.totalorder %s17, 1
      %p78 = por %p76, %p77
      %p80 = scmp.ne.s32.totalorder %s63, %s79
      %p81 = scmp.eq.s32.totalorder %s17, 0
      %p82 = por %p80, %p81
      %s83 = ssub.s32 %s18, %s30
      %p84 = scmp.eq.s32.totalorder %s83, 0
      %s86 = sadd.s32 %s85, 1
      %s87 = scalar_select %p84, %s85, %s86
      %p90 = pneg %p84
      %p91 = scmp.eq.s32.totalorder %s11, 1
      %p92 = por %p90, %p91
      %p93 = scmp.ne.s32.totalorder %s85, %s88
      %p94 = scmp.eq.s32.totalorder %s11, 0
      %p95 = por %p93, %p94
      %p96 = scmp.ne.s32.totalorder %s85, %s88
      %p97 = scmp.eq.s32.totalorder %s16, 1
      %p98 = por %p96, %p97
      %p99 = scmp.ne.s32.totalorder %s88, %s89
      %p100 = scmp.eq.s32.totalorder %s16, 0
      %p101 = por %p99, %p100
      %p102 = scmp.ne.s32.totalorder %s88, %s89
      %p103 = scmp.eq.s32.totalorder %s17, 1
      %p104 = por %p102, %p103
      %p106 = scmp.ne.s32.totalorder %s89, %s105
      %p107 = scmp.eq.s32.totalorder %s17, 0
      %p108 = por %p106, %p107
      %p109 = scmp.le.s32.totalorder 1, %s11
      %p110 = scmp.lt.s32.totalorder %s11, 3
      %p111 = pnand %p109, %p110
      %p112 = pneg %p111
      // Predicated region
      $region9: #{tpu_custom_call.1} parent=5 // pred_check
        _
      $region10: #{tpu_custom_call.1} parent=5 // pred_check_branch
        %114 = sbr.rel (%p111) target = $region12
      $region11: #{tpu_custom_call.1} parent=5 // pred_region
        %s115 = ssub.s32 %s11, 1
        // Predicated region
        $region13: #{tpu_custom_call.1} parent=11 // pred_check
          %p116 = pneg %p75
        $region14: #{tpu_custom_call.1} parent=11 // pred_check_branch
          %118 = sbr.rel (%p116) target = $region16
        $region15: #{tpu_custom_call.1} parent=11 // pred_region
          %s119 = smul.u32 32, %s21
          %p120 = scmp.lt.s32.totalorder %s119, 31
          %s121 = scalar_select %p120, %s119, 31
          %s122 = smul.addr %s121, 8
          %s123 = scalar_lea.vmem %s1, %s122
          %s124 = smul.u32 32, %s21
        $region16: #{tpu_custom_call.1} parent=11 // pred_fallthru
          _
      $region12: #{tpu_custom_call.1} parent=5 // pred_fallthru
        _
      %p125 = scmp.lt.s32.totalorder %s11, 2
      // Predicated region
      $region17: #{tpu_custom_call.1} parent=5 // pred_check
        %p126 = pneg %p125
      $region18: #{tpu_custom_call.1} parent=5 // pred_check_branch
        %128 = sbr.rel (%p126) target = $region20
      $region19: #{tpu_custom_call.1} parent=5 // pred_region
        // Predicated region
        $region21: #{tpu_custom_call.1} parent=19 // pred_check
          %p129 = pneg %p43
        $region22: #{tpu_custom_call.1} parent=19 // pred_check_branch
          %131 = sbr.rel (%p129) target = $region24
        $region23: #{tpu_custom_call.1} parent=19 // pred_region
          %s132 = smul.u32 16, %s18
          %p133 = scmp.lt.s32.totalorder %s132, 31
          %s134 = scalar_select %p133, %s132, 31
          %s135 = smul.addr %s134, 8
          %s136 = scalar_lea.vmem %s0, %s135
          %s137 = smul.u32 16, %s18
        $region24: #{tpu_custom_call.1} parent=19 // pred_fallthru
          _
      $region20: #{tpu_custom_call.1} parent=5 // pred_fallthru
        _
      %p138 = scmp.le.s32.totalorder 1, %s11
      %p139 = scmp.lt.s32.totalorder %s11, 3
      %p140 = pnand %p138, %p139
      %p141 = pneg %p140
      // Predicated region
      $region25: #{tpu_custom_call.1} parent=5 // pred_check
        _
      $region26: #{tpu_custom_call.1} parent=5 // pred_check_branch
        %143 = sbr.rel (%p140) target = $region28
      $region27: #{tpu_custom_call.1} parent=5 // pred_region
        %s144 = ssub.s32 %s11, 1
        %s145 = smul.u32 16, %s20
        %p146 = scmp.lt.s32.totalorder %s145, 31
        %s147 = scalar_select %p146, %s145, 31
        %s148 = smul.addr %s147, 8
        %s149 = scalar_lea.vmem %s0, %s148
        %p150 = pneg %p49
        %p151 = pneg %p46
        %s152 = smul.u32 32, %s21
        %p153 = scmp.lt.s32.totalorder %s152, 31
        %s154 = scalar_select %p153, %s152, 31
        %s155 = smul.addr %s154, 8
        %s156 = scalar_lea.vmem %s1, %s155
        %p157 = pneg %p75
        %p158 = pneg %p72
        %p159 = pneg %p101
        %p160 = pneg %p98
        %s161 = sand.u32 %s88, 1
        %s162 = scalar_lea.sflag [#allocation4], %s161
        %s163 = sand.u32 %s88, 1
        %s164 = smul.addr %s163, 128
        %s165 = scalar_lea.vmem [#allocation3], %s164
        %s166 = smul.u32 16, %s20
        %p167 = scmp.lt.s32.totalorder %s166, 31
        %s168 = scalar_select %p167, %s166, 31
        %s169 = smul.addr %s168, 8
        %s170 = scalar_lea.vmem %s0, %s169
        %s171 = smul.u32 16, %s20
        %s172 = smul.u32 32, %s21
        %p173 = scmp.lt.s32.totalorder %s172, 31
        %s174 = scalar_select %p173, %s172, 31
        %s175 = smul.addr %s174, 8
        %s176 = scalar_lea.vmem %s1, %s175
        %s177 = smul.u32 32, %s21
        %s178 = smul.u32 16, %s20
        %p179 = scmp.eq.s32.totalorder %s21, 0
        // Predicated region
        $region29: #{tpu_custom_call.1} parent=27 // pred_check
          %p180 = pneg %p179
        $region30: #{tpu_custom_call.1} parent=27 // pred_check_branch
          %182 = sbr.rel (%p180) target = $region32
        $region31: #{tpu_custom_call.1} parent=27 // pred_region
          %183 = vst [vmem:[#allocation2] sm:$0xff] 0.0
          %184 = vst [vmem:[#allocation2 + $0x8] sm:$0xff] 0.0
          %185 = vst [vmem:[#allocation2 + $0x10] sm:$0xff] 0.0
          %186 = vst [vmem:[#allocation2 + $0x18] sm:$0xff] 0.0
          %187 = vst [vmem:[#allocation2 + $0x20] sm:$0xff] 0.0
          %188 = vst [vmem:[#allocation2 + $0x28] sm:$0xff] 0.0
          %189 = vst [vmem:[#allocation2 + $0x30] sm:$0xff] 0.0
          %190 = vst [vmem:[#allocation2 + $0x38] sm:$0xff] 0.0
          %191 = vst [vmem:[#allocation2 + $0x40] sm:$0xff] 0.0
          %192 = vst [vmem:[#allocation2 + $0x48] sm:$0xff] 0.0
          %193 = vst [vmem:[#allocation2 + $0x50] sm:$0xff] 0.0
          %194 = vst [vmem:[#allocation2 + $0x58] sm:$0xff] 0.0
          %195 = vst [vmem:[#allocation2 + $0x60] sm:$0xff] 0.0
          %196 = vst [vmem:[#allocation2 + $0x68] sm:$0xff] 0.0
          %197 = vst [vmem:[#allocation2 + $0x70] sm:$0xff] 0.0
          %198 = vst [vmem:[#allocation2 + $0x78] sm:$0xff] 0.0
        $region32: #{tpu_custom_call.1} parent=27 // pred_fallthru
          _
        %v199 = vld [vmem:[%s170] sm:$0xff]
        %v200 = vld [vmem:[%s170 + $0x8] sm:$0xff]
        %v201 = vld [vmem:[%s170 + $0x10] sm:$0xff]
        %v202 = vld [vmem:[%s170 + $0x18] sm:$0xff]
        %v203 = vld [vmem:[%s170 + $0x20] sm:$0xff]
        %v204 = vld [vmem:[%s170 + $0x28] sm:$0xff]
        %v205 = vld [vmem:[%s170 + $0x30] sm:$0xff]
        %v206 = vld [vmem:[%s170 + $0x38] sm:$0xff]
        %v207 = vld [vmem:[%s170 + $0x40] sm:$0xff]
        %v208 = vld [vmem:[%s170 + $0x48] sm:$0xff]
        %v209 = vld [vmem:[%s170 + $0x50] sm:$0xff]
        %v210 = vld [vmem:[%s170 + $0x58] sm:$0xff]
        %v211 = vld [vmem:[%s170 + $0x60] sm:$0xff]
        %v212 = vld [vmem:[%s170 + $0x68] sm:$0xff]
        %v213 = vld [vmem:[%s170 + $0x70] sm:$0xff]
        %v214 = vld [vmem:[%s170 + $0x78] sm:$0xff]
        %v215 = vld [vmem:[%s176] sm:$0xff]
        %v216 = vld [vmem:[%s176 + $0x8] sm:$0xff]
        %v217 = vld [vmem:[%s176 + $0x10] sm:$0xff]
        %v218 = vld [vmem:[%s176 + $0x18] sm:$0xff]
        %v219 = vld [vmem:[%s176 + $0x20] sm:$0xff]
        %v220 = vld [vmem:[%s176 + $0x28] sm:$0xff]
        %v221 = vld [vmem:[%s176 + $0x30] sm:$0xff]
        %v222 = vld [vmem:[%s176 + $0x38] sm:$0xff]
        %v223 = vld [vmem:[%s176 + $0x40] sm:$0xff]
        %v224 = vld [vmem:[%s176 + $0x48] sm:$0xff]
        %v225 = vld [vmem:[%s176 + $0x50] sm:$0xff]
        %v226 = vld [vmem:[%s176 + $0x58] sm:$0xff]
        %v227 = vld [vmem:[%s176 + $0x60] sm:$0xff]
        %v228 = vld [vmem:[%s176 + $0x68] sm:$0xff]
        %v229 = vld [vmem:[%s176 + $0x70] sm:$0xff]
        %v230 = vld [vmem:[%s176 + $0x78] sm:$0xff]
        %v231 = vld [vmem:[%s176 + $0x80] sm:$0xff]
        %v232 = vld [vmem:[%s176 + $0x88] sm:$0xff]
        %v233 = vld [vmem:[%s176 + $0x90] sm:$0xff]
        %v234 = vld [vmem:[%s176 + $0x98] sm:$0xff]
        %v235 = vld [vmem:[%s176 + $0xa0] sm:$0xff]
        %v236 = vld [vmem:[%s176 + $0xa8] sm:$0xff]
        %v237 = vld [vmem:[%s176 + $0xb0] sm:$0xff]
        %v238 = vld [vmem:[%s176 + $0xb8] sm:$0xff]
        %v239 = vld [vmem:[%s176 + $0xc0] sm:$0xff]
        %v240 = vld [vmem:[%s176 + $0xc8] sm:$0xff]
        %v241 = vld [vmem:[%s176 + $0xd0] sm:$0xff]
        %v242 = vld [vmem:[%s176 + $0xd8] sm:$0xff]
        %v243 = vld [vmem:[%s176 + $0xe0] sm:$0xff]
        %v244 = vld [vmem:[%s176 + $0xe8] sm:$0xff]
        %v245 = vld [vmem:[%s176 + $0xf0] sm:$0xff]
        %v246 = vld [vmem:[%s176 + $0xf8] sm:$0xff]
        %v247 = vlaneseq
        %v248 = vand.u32 %v247, 127
        %v249 = vadd.s32 %v248, 128
        %s250 = smul.u32 %s21, 256
        %v251 = vstv %s250
        %v252 = vadd.s32 %v248, %v251
        %v253 = vadd.s32 %v249, %v251
        %254 = vset.pattern.permute.xlu0 0
        %255 = vperm.xlu0 %254, %v199
        %v256 = vpop.permute.xlu0 %255
        %257 = vset.pattern.permute.xlu0 0
        %258 = vperm.xlu0 %257, %v200
        %v259 = vpop.permute.xlu0 %258
        %260 = vset.pattern.permute.xlu0 0
        %261 = vperm.xlu0 %260, %v201
        %v262 = vpop.permute.xlu0 %261
        %263 = vset.pattern.permute.xlu0 0
        %264 = vperm.xlu0 %263, %v202
        %v265 = vpop.permute.xlu0 %264
        %266 = vset.pattern.permute.xlu0 0
        %267 = vperm.xlu0 %266, %v203
        %v268 = vpop.permute.xlu0 %267
        %269 = vset.pattern.permute.xlu0 0
        %270 = vperm.xlu0 %269, %v204
        %v271 = vpop.permute.xlu0 %270
        %272 = vset.pattern.permute.xlu0 0
        %273 = vperm.xlu0 %272, %v205
        %v274 = vpop.permute.xlu0 %273
        %275 = vset.pattern.permute.xlu0 0
        %276 = vperm.xlu0 %275, %v206
        %v277 = vpop.permute.xlu0 %276
        %278 = vset.pattern.permute.xlu0 0
        %279 = vperm.xlu0 %278, %v207
        %v280 = vpop.permute.xlu0 %279
        %281 = vset.pattern.permute.xlu0 0
        %282 = vperm.xlu0 %281, %v208
        %v283 = vpop.permute.xlu0 %282
        %284 = vset.pattern.permute.xlu0 0
        %285 = vperm.xlu0 %284, %v209
        %v286 = vpop.permute.xlu0 %285
        %287 = vset.pattern.permute.xlu0 0
        %288 = vperm.xlu0 %287, %v210
        %v289 = vpop.permute.xlu0 %288
        %290 = vset.pattern.permute.xlu0 0
        %291 = vperm.xlu0 %290, %v211
        %v292 = vpop.permute.xlu0 %291
        %293 = vset.pattern.permute.xlu0 0
        %294 = vperm.xlu0 %293, %v212
        %v295 = vpop.permute.xlu0 %294
        %296 = vset.pattern.permute.xlu0 0
        %297 = vperm.xlu0 %296, %v213
        %v298 = vpop.permute.xlu0 %297
        %299 = vset.pattern.permute.xlu0 0
        %300 = vperm.xlu0 %299, %v214
        %v301 = vpop.permute.xlu0 %300
        %vm302 = vcmp.eq.s32.totalorder %v256, %v252
        %vm303 = vcmp.eq.s32.totalorder %v256, %v253
        %vm304 = vcmp.eq.s32.totalorder %v259, %v252
        %vm305 = vcmp.eq.s32.totalorder %v259, %v253
        %vm306 = vcmp.eq.s32.totalorder %v262, %v252
        %vm307 = vcmp.eq.s32.totalorder %v262, %v253
        %vm308 = vcmp.eq.s32.totalorder %v265, %v252
        %vm309 = vcmp.eq.s32.totalorder %v265, %v253
        %vm310 = vcmp.eq.s32.totalorder %v268, %v252
        %vm311 = vcmp.eq.s32.totalorder %v268, %v253
        %vm312 = vcmp.eq.s32.totalorder %v271, %v252
        %vm313 = vcmp.eq.s32.totalorder %v271, %v253
        %vm314 = vcmp.eq.s32.totalorder %v274, %v252
        %vm315 = vcmp.eq.s32.totalorder %v274, %v253
        %vm316 = vcmp.eq.s32.totalorder %v277, %v252
        %vm317 = vcmp.eq.s32.totalorder %v277, %v253
        %vm318 = vcmp.eq.s32.totalorder %v280, %v252
        %vm319 = vcmp.eq.s32.totalorder %v280, %v253
        %vm320 = vcmp.eq.s32.totalorder %v283, %v252
        %vm321 = vcmp.eq.s32.totalorder %v283, %v253
        %vm322 = vcmp.eq.s32.totalorder %v286, %v252
        %vm323 = vcmp.eq.s32.totalorder %v286, %v253
        %vm324 = vcmp.eq.s32.totalorder %v289, %v252
        %vm325 = vcmp.eq.s32.totalorder %v289, %v253
        %vm326 = vcmp.eq.s32.totalorder %v292, %v252
        %vm327 = vcmp.eq.s32.totalorder %v292, %v253
        %vm328 = vcmp.eq.s32.totalorder %v295, %v252
        %vm329 = vcmp.eq.s32.totalorder %v295, %v253
        %vm330 = vcmp.eq.s32.totalorder %v298, %v252
        %vm331 = vcmp.eq.s32.totalorder %v298, %v253
        %vm332 = vcmp.eq.s32.totalorder %v301, %v252
        %vm333 = vcmp.eq.s32.totalorder %v301, %v253
        %v334 = vsel %vm302, 1, 0
        %v335 = vsel %vm303, 1, 0
        %v336 = vsel %vm304, 1, 0
        %v337 = vsel %vm305, 1, 0
        %v338 = vsel %vm306, 1, 0
        %v339 = vsel %vm307, 1, 0
        %v340 = vsel %vm308, 1, 0
        %v341 = vsel %vm309, 1, 0
        %v342 = vsel %vm310, 1, 0
        %v343 = vsel %vm311, 1, 0
        %v344 = vsel %vm312, 1, 0
        %v345 = vsel %vm313, 1, 0
        %v346 = vsel %vm314, 1, 0
        %v347 = vsel %vm315, 1, 0
        %v348 = vsel %vm316, 1, 0
        %v349 = vsel %vm317, 1, 0
        %v350 = vsel %vm318, 1, 0
        %v351 = vsel %vm319, 1, 0
        %v352 = vsel %vm320, 1, 0
        %v353 = vsel %vm321, 1, 0
        %v354 = vsel %vm322, 1, 0
        %v355 = vsel %vm323, 1, 0
        %v356 = vsel %vm324, 1, 0
        %v357 = vsel %vm325, 1, 0
        %v358 = vsel %vm326, 1, 0
        %v359 = vsel %vm327, 1, 0
        %v360 = vsel %vm328, 1, 0
        %v361 = vsel %vm329, 1, 0
        %v362 = vsel %vm330, 1, 0
        %v363 = vsel %vm331, 1, 0
        %v364 = vsel %vm332, 1, 0
        %v365 = vsel %vm333, 1, 0
        %366 = vset.pattern.permute.xlu0 1
        %367 = vperm.xlu0 %366, %v199
        %v368 = vpop.permute.xlu0 %367
        %369 = vset.pattern.permute.xlu0 1
        %370 = vperm.xlu0 %369, %v200
        %v371 = vpop.permute.xlu0 %370
        %372 = vset.pattern.permute.xlu0 1
        %373 = vperm.xlu0 %372, %v201
        %v374 = vpop.permute.xlu0 %373
        %375 = vset.pattern.permute.xlu0 1
        %376 = vperm.xlu0 %375, %v202
        %v377 = vpop.permute.xlu0 %376
        %378 = vset.pattern.permute.xlu0 1
        %379 = vperm.xlu0 %378, %v203
        %v380 = vpop.permute.xlu0 %379
        %381 = vset.pattern.permute.xlu0 1
        %382 = vperm.xlu0 %381, %v204
        %v383 = vpop.permute.xlu0 %382
        %384 = vset.pattern.permute.xlu0 1
        %385 = vperm.xlu0 %384, %v205
        %v386 = vpop.permute.xlu0 %385
        %387 = vset.pattern.permute.xlu0 1
        %388 = vperm.xlu0 %387, %v206
        %v389 = vpop.permute.xlu0 %388
        %390 = vset.pattern.permute.xlu0 1
        %391 = vperm.xlu0 %390, %v207
        %v392 = vpop.permute.xlu0 %391
        %393 = vset.pattern.permute.xlu0 1
        %394 = vperm.xlu0 %393, %v208
        %v395 = vpop.permute.xlu0 %394
        %396 = vset.pattern.permute.xlu0 1
        %397 = vperm.xlu0 %396, %v209
        %v398 = vpop.permute.xlu0 %397
        %399 = vset.pattern.permute.xlu0 1
        %400 = vperm.xlu0 %399, %v210
        %v401 = vpop.permute.xlu0 %400
        %402 = vset.pattern.permute.xlu0 1
        %403 = vperm.xlu0 %402, %v211
        %v404 = vpop.permute.xlu0 %403
        %405 = vset.pattern.permute.xlu0 1
        %406 = vperm.xlu0 %405, %v212
        %v407 = vpop.permute.xlu0 %406
        %408 = vset.pattern.permute.xlu0 1
        %409 = vperm.xlu0 %408, %v213
        %v410 = vpop.permute.xlu0 %409
        %411 = vset.pattern.permute.xlu0 1
        %412 = vperm.xlu0 %411, %v214
        %v413 = vpop.permute.xlu0 %412
        %vm414 = vcmp.eq.s32.totalorder %v368, %v252
        %vm415 = vcmp.eq.s32.totalorder %v368, %v253
        %vm416 = vcmp.eq.s32.totalorder %v371, %v252
        %vm417 = vcmp.eq.s32.totalorder %v371, %v253
        %vm418 = vcmp.eq.s32.totalorder %v374, %v252
        %vm419 = vcmp.eq.s32.totalorder %v374, %v253
        %vm420 = vcmp.eq.s32.totalorder %v377, %v252
        %vm421 = vcmp.eq.s32.totalorder %v377, %v253
        %vm422 = vcmp.eq.s32.totalorder %v380, %v252
        %vm423 = vcmp.eq.s32.totalorder %v380, %v253
        %vm424 = vcmp.eq.s32.totalorder %v383, %v252
        %vm425 = vcmp.eq.s32.totalorder %v383, %v253
        %vm426 = vcmp.eq.s32.totalorder %v386, %v252
        %vm427 = vcmp.eq.s32.totalorder %v386, %v253
        %vm428 = vcmp.eq.s32.totalorder %v389, %v252
        %vm429 = vcmp.eq.s32.totalorder %v389, %v253
        %vm430 = vcmp.eq.s32.totalorder %v392, %v252
        %vm431 = vcmp.eq.s32.totalorder %v392, %v253
        %vm432 = vcmp.eq.s32.totalorder %v395, %v252
        %vm433 = vcmp.eq.s32.totalorder %v395, %v253
        %vm434 = vcmp.eq.s32.totalorder %v398, %v252
        %vm435 = vcmp.eq.s32.totalorder %v398, %v253
        %vm436 = vcmp.eq.s32.totalorder %v401, %v252
        %vm437 = vcmp.eq.s32.totalorder %v401, %v253
        %vm438 = vcmp.eq.s32.totalorder %v404, %v252
        %vm439 = vcmp.eq.s32.totalorder %v404, %v253
        %vm440 = vcmp.eq.s32.totalorder %v407, %v252
        %vm441 = vcmp.eq.s32.totalorder %v407, %v253
        %vm442 = vcmp.eq.s32.totalorder %v410, %v252
        %vm443 = vcmp.eq.s32.totalorder %v410, %v253
        %vm444 = vcmp.eq.s32.totalorder %v413, %v252
        %vm445 = vcmp.eq.s32.totalorder %v413, %v253
        %v446 = vsel %vm414, 1, 0
        %v447 = vsel %vm415, 1, 0
        %v448 = vsel %vm416, 1, 0
        %v449 = vsel %vm417, 1, 0
        %v450 = vsel %vm418, 1, 0
        %v451 = vsel %vm419, 1, 0
        %v452 = vsel %vm420, 1, 0
        %v453 = vsel %vm421, 1, 0
        %v454 = vsel %vm422, 1, 0
        %v455 = vsel %vm423, 1, 0
        %v456 = vsel %vm424, 1, 0
        %v457 = vsel %vm425, 1, 0
        %v458 = vsel %vm426, 1, 0
        %v459 = vsel %vm427, 1, 0
        %v460 = vsel %vm428, 1, 0
        %v461 = vsel %vm429, 1, 0
        %v462 = vsel %vm430, 1, 0
        %v463 = vsel %vm431, 1, 0
        %v464 = vsel %vm432, 1, 0
        %v465 = vsel %vm433, 1, 0
        %v466 = vsel %vm434, 1, 0
        %v467 = vsel %vm435, 1, 0
        %v468 = vsel %vm436, 1, 0
        %v469 = vsel %vm437, 1, 0
        %v470 = vsel %vm438, 1, 0
        %v471 = vsel %vm439, 1, 0
        %v472 = vsel %vm440, 1, 0
        %v473 = vsel %vm441, 1, 0
        %v474 = vsel %vm442, 1, 0
        %v475 = vsel %vm443, 1, 0
        %v476 = vsel %vm444, 1, 0
        %v477 = vsel %vm445, 1, 0
        %v478 = vadd.s32 %v334, %v446
        %v479 = vadd.s32 %v335, %v447
        %v480 = vadd.s32 %v336, %v448
        %v481 = vadd.s32 %v337, %v449
        %v482 = vadd.s32 %v338, %v450
        %v483 = vadd.s32 %v339, %v451
        %v484 = vadd.s32 %v340, %v452
        %v485 = vadd.s32 %v341, %v453
        %v486 = vadd.s32 %v342, %v454
        %v487 = vadd.s32 %v343, %v455
        %v488 = vadd.s32 %v344, %v456
        %v489 = vadd.s32 %v345, %v457
        %v490 = vadd.s32 %v346, %v458
        %v491 = vadd.s32 %v347, %v459
        %v492 = vadd.s32 %v348, %v460
        %v493 = vadd.s32 %v349, %v461
        %v494 = vadd.s32 %v350, %v462
        %v495 = vadd.s32 %v351, %v463
        %v496 = vadd.s32 %v352, %v464
        %v497 = vadd.s32 %v353, %v465
        %v498 = vadd.s32 %v354, %v466
        %v499 = vadd.s32 %v355, %v467
        %v500 = vadd.s32 %v356, %v468
        %v501 = vadd.s32 %v357, %v469
        %v502 = vadd.s32 %v358, %v470
        %v503 = vadd.s32 %v359, %v471
        %v504 = vadd.s32 %v360, %v472
        %v505 = vadd.s32 %v361, %v473
        %v506 = vadd.s32 %v362, %v474
        %v507 = vadd.s32 %v363, %v475
        %v508 = vadd.s32 %v364, %v476
        %v509 = vadd.s32 %v365, %v477
        %510 = vset.pattern.permute.xlu0 2
        %511 = vperm.xlu0 %510, %v199
        %v512 = vpop.permute.xlu0 %511
        %513 = vset.pattern.permute.xlu0 2
        %514 = vperm.xlu0 %513, %v200
        %v515 = vpop.permute.xlu0 %514
        %516 = vset.pattern.permute.xlu0 2
        %517 = vperm.xlu0 %516, %v201
        %v518 = vpop.permute.xlu0 %517
        %519 = vset.pattern.permute.xlu0 2
        %520 = vperm.xlu0 %519, %v202
        %v521 = vpop.permute.xlu0 %520
        %522 = vset.pattern.permute.xlu0 2
        %523 = vperm.xlu0 %522, %v203
        %v524 = vpop.permute.xlu0 %523
        %525 = vset.pattern.permute.xlu0 2
        %526 = vperm.xlu0 %525, %v204
        %v527 = vpop.permute.xlu0 %526
        %528 = vset.pattern.permute.xlu0 2
        %529 = vperm.xlu0 %528, %v205
        %v530 = vpop.permute.xlu0 %529
        %531 = vset.pattern.permute.xlu0 2
        %532 = vperm.xlu0 %531, %v206
        %v533 = vpop.permute.xlu0 %532
        %534 = vset.pattern.permute.xlu0 2
        %535 = vperm.xlu0 %534, %v207
        %v536 = vpop.permute.xlu0 %535
        %537 = vset.pattern.permute.xlu0 2
        %538 = vperm.xlu0 %537, %v208
        %v539 = vpop.permute.xlu0 %538
        %540 = vset.pattern.permute.xlu0 2
        %541 = vperm.xlu0 %540, %v209
        %v542 = vpop.permute.xlu0 %541
        %543 = vset.pattern.permute.xlu0 2
        %544 = vperm.xlu0 %543, %v210
        %v545 = vpop.permute.xlu0 %544
        %546 = vset.pattern.permute.xlu0 2
        %547 = vperm.xlu0 %546, %v211
        %v548 = vpop.permute.xlu0 %547
        %549 = vset.pattern.permute.xlu0 2
        %550 = vperm.xlu0 %549, %v212
        %v551 = vpop.permute.xlu0 %550
        %552 = vset.pattern.permute.xlu0 2
        %553 = vperm.xlu0 %552, %v213
        %v554 = vpop.permute.xlu0 %553
        %555 = vset.pattern.permute.xlu0 2
        %556 = vperm.xlu0 %555, %v214
        %v557 = vpop.permute.xlu0 %556
        %vm558 = vcmp.eq.s32.totalorder %v512, %v252
        %vm559 = vcmp.eq.s32.totalorder %v512, %v253
        %vm560 = vcmp.eq.s32.totalorder %v515, %v252
        %vm561 = vcmp.eq.s32.totalorder %v515, %v253
        %vm562 = vcmp.eq.s32.totalorder %v518, %v252
        %vm563 = vcmp.eq.s32.totalorder %v518, %v253
        %vm564 = vcmp.eq.s32.totalorder %v521, %v252
        %vm565 = vcmp.eq.s32.totalorder %v521, %v253
        %vm566 = vcmp.eq.s32.totalorder %v524, %v252
        %vm567 = vcmp.eq.s32.totalorder %v524, %v253
        %vm568 = vcmp.eq.s32.totalorder %v527, %v252
        %vm569 = vcmp.eq.s32.totalorder %v527, %v253
        %vm570 = vcmp.eq.s32.totalorder %v530, %v252
        %vm571 = vcmp.eq.s32.totalorder %v530, %v253
        %vm572 = vcmp.eq.s32.totalorder %v533, %v252
        %vm573 = vcmp.eq.s32.totalorder %v533, %v253
        %vm574 = vcmp.eq.s32.totalorder %v536, %v252
        %vm575 = vcmp.eq.s32.totalorder %v536, %v253
        %vm576 = vcmp.eq.s32.totalorder %v539, %v252
        %vm577 = vcmp.eq.s32.totalorder %v539, %v253
        %vm578 = vcmp.eq.s32.totalorder %v542, %v252
        %vm579 = vcmp.eq.s32.totalorder %v542, %v253
        %vm580 = vcmp.eq.s32.totalorder %v545, %v252
        %vm581 = vcmp.eq.s32.totalorder %v545, %v253
        %vm582 = vcmp.eq.s32.totalorder %v548, %v252
        %vm583 = vcmp.eq.s32.totalorder %v548, %v253
        %vm584 = vcmp.eq.s32.totalorder %v551, %v252
        %vm585 = vcmp.eq.s32.totalorder %v551, %v253
        %vm586 = vcmp.eq.s32.totalorder %v554, %v252
        %vm587 = vcmp.eq.s32.totalorder %v554, %v253
        %vm588 = vcmp.eq.s32.totalorder %v557, %v252
        %vm589 = vcmp.eq.s32.totalorder %v557, %v253
        %v590 = vsel %vm558, 1, 0
        %v591 = vsel %vm559, 1, 0
        %v592 = vsel %vm560, 1, 0
        %v593 = vsel %vm561, 1, 0
        %v594 = vsel %vm562, 1, 0
        %v595 = vsel %vm563, 1, 0
        %v596 = vsel %vm564, 1, 0
        %v597 = vsel %vm565, 1, 0
        %v598 = vsel %vm566, 1, 0
        %v599 = vsel %vm567, 1, 0
        %v600 = vsel %vm568, 1, 0
        %v601 = vsel %vm569, 1, 0
        %v602 = vsel %vm570, 1, 0
        %v603 = vsel %vm571, 1, 0
        %v604 = vsel %vm572, 1, 0
        %v605 = vsel %vm573, 1, 0
        %v606 = vsel %vm574, 1, 0
        %v607 = vsel %vm575, 1, 0
        %v608 = vsel %vm576, 1, 0
        %v609 = vsel %vm577, 1, 0
        %v610 = vsel %vm578, 1, 0
        %v611 = vsel %vm579, 1, 0
        %v612 = vsel %vm580, 1, 0
        %v613 = vsel %vm581, 1, 0
        %v614 = vsel %vm582, 1, 0
        %v615 = vsel %vm583, 1, 0
        %v616 = vsel %vm584, 1, 0
        %v617 = vsel %vm585, 1, 0
        %v618 = vsel %vm586, 1, 0
        %v619 = vsel %vm587, 1, 0
        %v620 = vsel %vm588, 1, 0
        %v621 = vsel %vm589, 1, 0
        %v622 = vadd.s32 %v478, %v590
        %v623 = vadd.s32 %v479, %v591
        %v624 = vadd.s32 %v480, %v592
        %v625 = vadd.s32 %v481, %v593
        %v626 = vadd.s32 %v482, %v594
        %v627 = vadd.s32 %v483, %v595
        %v628 = vadd.s32 %v484, %v596
        %v629 = vadd.s32 %v485, %v597
        %v630 = vadd.s32 %v486, %v598
        %v631 = vadd.s32 %v487, %v599
        %v632 = vadd.s32 %v488, %v600
        %v633 = vadd.s32 %v489, %v601
        %v634 = vadd.s32 %v490, %v602
        %v635 = vadd.s32 %v491, %v603
        %v636 = vadd.s32 %v492, %v604
        %v637 = vadd.s32 %v493, %v605
        %v638 = vadd.s32 %v494, %v606
        %v639 = vadd.s32 %v495, %v607
        %v640 = vadd.s32 %v496, %v608
        %v641 = vadd.s32 %v497, %v609
        %v642 = vadd.s32 %v498, %v610
        %v643 = vadd.s32 %v499, %v611
        %v644 = vadd.s32 %v500, %v612
        %v645 = vadd.s32 %v501, %v613
        %v646 = vadd.s32 %v502, %v614
        %v647 = vadd.s32 %v503, %v615
        %v648 = vadd.s32 %v504, %v616
        %v649 = vadd.s32 %v505, %v617
        %v650 = vadd.s32 %v506, %v618
        %v651 = vadd.s32 %v507, %v619
        %v652 = vadd.s32 %v508, %v620
        %v653 = vadd.s32 %v509, %v621
        %654 = vset.pattern.permute.xlu0 3
        %655 = vperm.xlu0 %654, %v199
        %v656 = vpop.permute.xlu0 %655
        %657 = vset.pattern.permute.xlu0 3
        %658 = vperm.xlu0 %657, %v200
        %v659 = vpop.permute.xlu0 %658
        %660 = vset.pattern.permute.xlu0 3
        %661 = vperm.xlu0 %660, %v201
        %v662 = vpop.permute.xlu0 %661
        %663 = vset.pattern.permute.xlu0 3
        %664 = vperm.xlu0 %663, %v202
        %v665 = vpop.permute.xlu0 %664
        %666 = vset.pattern.permute.xlu0 3
        %667 = vperm.xlu0 %666, %v203
        %v668 = vpop.permute.xlu0 %667
        %669 = vset.pattern.permute.xlu0 3
        %670 = vperm.xlu0 %669, %v204
        %v671 = vpop.permute.xlu0 %670
        %672 = vset.pattern.permute.xlu0 3
        %673 = vperm.xlu0 %672, %v205
        %v674 = vpop.permute.xlu0 %673
        %675 = vset.pattern.permute.xlu0 3
        %676 = vperm.xlu0 %675, %v206
        %v677 = vpop.permute.xlu0 %676
        %678 = vset.pattern.permute.xlu0 3
        %679 = vperm.xlu0 %678, %v207
        %v680 = vpop.permute.xlu0 %679
        %681 = vset.pattern.permute.xlu0 3
        %682 = vperm.xlu0 %681, %v208
        %v683 = vpop.permute.xlu0 %682
        %684 = vset.pattern.permute.xlu0 3
        %685 = vperm.xlu0 %684, %v209
        %v686 = vpop.permute.xlu0 %685
        %687 = vset.pattern.permute.xlu0 3
        %688 = vperm.xlu0 %687, %v210
        %v689 = vpop.permute.xlu0 %688
        %690 = vset.pattern.permute.xlu0 3
        %691 = vperm.xlu0 %690, %v211
        %v692 = vpop.permute.xlu0 %691
        %693 = vset.pattern.permute.xlu0 3
        %694 = vperm.xlu0 %693, %v212
        %v695 = vpop.permute.xlu0 %694
        %696 = vset.pattern.permute.xlu0 3
        %697 = vperm.xlu0 %696, %v213
        %v698 = vpop.permute.xlu0 %697
        %699 = vset.pattern.permute.xlu0 3
        %700 = vperm.xlu0 %699, %v214
        %v701 = vpop.permute.xlu0 %700
        %vm702 = vcmp.eq.s32.totalorder %v656, %v252
        %vm703 = vcmp.eq.s32.totalorder %v656, %v253
        %vm704 = vcmp.eq.s32.totalorder %v659, %v252
        %vm705 = vcmp.eq.s32.totalorder %v659, %v253
        %vm706 = vcmp.eq.s32.totalorder %v662, %v252
        %vm707 = vcmp.eq.s32.totalorder %v662, %v253
        %vm708 = vcmp.eq.s32.totalorder %v665, %v252
        %vm709 = vcmp.eq.s32.totalorder %v665, %v253
        %vm710 = vcmp.eq.s32.totalorder %v668, %v252
        %vm711 = vcmp.eq.s32.totalorder %v668, %v253
        %vm712 = vcmp.eq.s32.totalorder %v671, %v252
        %vm713 = vcmp.eq.s32.totalorder %v671, %v253
        %vm714 = vcmp.eq.s32.totalorder %v674, %v252
        %vm715 = vcmp.eq.s32.totalorder %v674, %v253
        %vm716 = vcmp.eq.s32.totalorder %v677, %v252
        %vm717 = vcmp.eq.s32.totalorder %v677, %v253
        %vm718 = vcmp.eq.s32.totalorder %v680, %v252
        %vm719 = vcmp.eq.s32.totalorder %v680, %v253
        %vm720 = vcmp.eq.s32.totalorder %v683, %v252
        %vm721 = vcmp.eq.s32.totalorder %v683, %v253
        %vm722 = vcmp.eq.s32.totalorder %v686, %v252
        %vm723 = vcmp.eq.s32.totalorder %v686, %v253
        %vm724 = vcmp.eq.s32.totalorder %v689, %v252
        %vm725 = vcmp.eq.s32.totalorder %v689, %v253
        %vm726 = vcmp.eq.s32.totalorder %v692, %v252
        %vm727 = vcmp.eq.s32.totalorder %v692, %v253
        %vm728 = vcmp.eq.s32.totalorder %v695, %v252
        %vm729 = vcmp.eq.s32.totalorder %v695, %v253
        %vm730 = vcmp.eq.s32.totalorder %v698, %v252
        %vm731 = vcmp.eq.s32.totalorder %v698, %v253
        %vm732 = vcmp.eq.s32.totalorder %v701, %v252
        %vm733 = vcmp.eq.s32.totalorder %v701, %v253
        %v734 = vsel %vm702, 1, 0
        %v735 = vsel %vm703, 1, 0
        %v736 = vsel %vm704, 1, 0
        %v737 = vsel %vm705, 1, 0
        %v738 = vsel %vm706, 1, 0
        %v739 = vsel %vm707, 1, 0
        %v740 = vsel %vm708, 1, 0
        %v741 = vsel %vm709, 1, 0
        %v742 = vsel %vm710, 1, 0
        %v743 = vsel %vm711, 1, 0
        %v744 = vsel %vm712, 1, 0
        %v745 = vsel %vm713, 1, 0
        %v746 = vsel %vm714, 1, 0
        %v747 = vsel %vm715, 1, 0
        %v748 = vsel %vm716, 1, 0
        %v749 = vsel %vm717, 1, 0
        %v750 = vsel %vm718, 1, 0
        %v751 = vsel %vm719, 1, 0
        %v752 = vsel %vm720, 1, 0
        %v753 = vsel %vm721, 1, 0
        %v754 = vsel %vm722, 1, 0
        %v755 = vsel %vm723, 1, 0
        %v756 = vsel %vm724, 1, 0
        %v757 = vsel %vm725, 1, 0
        %v758 = vsel %vm726, 1, 0
        %v759 = vsel %vm727, 1, 0
        %v760 = vsel %vm728, 1, 0
        %v761 = vsel %vm729, 1, 0
        %v762 = vsel %vm730, 1, 0
        %v763 = vsel %vm731, 1, 0
        %v764 = vsel %vm732, 1, 0
        %v765 = vsel %vm733, 1, 0
        %v766 = vadd.s32 %v622, %v734
        %v767 = vadd.s32 %v623, %v735
        %v768 = vadd.s32 %v624, %v736
        %v769 = vadd.s32 %v625, %v737
        %v770 = vadd.s32 %v626, %v738
        %v771 = vadd.s32 %v627, %v739
        %v772 = vadd.s32 %v628, %v740
        %v773 = vadd.s32 %v629, %v741
        %v774 = vadd.s32 %v630, %v742
        %v775 = vadd.s32 %v631, %v743
        %v776 = vadd.s32 %v632, %v744
        %v777 = vadd.s32 %v633, %v745
        %v778 = vadd.s32 %v634, %v746
        %v779 = vadd.s32 %v635, %v747
        %v780 = vadd.s32 %v636, %v748
        %v781 = vadd.s32 %v637, %v749
        %v782 = vadd.s32 %v638, %v750
        %v783 = vadd.s32 %v639, %v751
        %v784 = vadd.s32 %v640, %v752
        %v785 = vadd.s32 %v641, %v753
        %v786 = vadd.s32 %v642, %v754
        %v787 = vadd.s32 %v643, %v755
        %v788 = vadd.s32 %v644, %v756
        %v789 = vadd.s32 %v645, %v757
        %v790 = vadd.s32 %v646, %v758
        %v791 = vadd.s32 %v647, %v759
        %v792 = vadd.s32 %v648, %v760
        %v793 = vadd.s32 %v649, %v761
        %v794 = vadd.s32 %v650, %v762
        %v795 = vadd.s32 %v651, %v763
        %v796 = vadd.s32 %v652, %v764
        %v797 = vadd.s32 %v653, %v765
        %v798 = vld [vmem:[#allocation2] sm:$0xff]
        %v799 = vld [vmem:[#allocation2 + $0x8] sm:$0xff]
        %v800 = vld [vmem:[#allocation2 + $0x10] sm:$0xff]
        %v801 = vld [vmem:[#allocation2 + $0x18] sm:$0xff]
        %v802 = vld [vmem:[#allocation2 + $0x20] sm:$0xff]
        %v803 = vld [vmem:[#allocation2 + $0x28] sm:$0xff]
        %v804 = vld [vmem:[#allocation2 + $0x30] sm:$0xff]
        %v805 = vld [vmem:[#allocation2 + $0x38] sm:$0xff]
        %v806 = vld [vmem:[#allocation2 + $0x40] sm:$0xff]
        %v807 = vld [vmem:[#allocation2 + $0x48] sm:$0xff]
        %v808 = vld [vmem:[#allocation2 + $0x50] sm:$0xff]
        %v809 = vld [vmem:[#allocation2 + $0x58] sm:$0xff]
        %v810 = vld [vmem:[#allocation2 + $0x60] sm:$0xff]
        %v811 = vld [vmem:[#allocation2 + $0x68] sm:$0xff]
        %v812 = vld [vmem:[#allocation2 + $0x70] sm:$0xff]
        %v813 = vld [vmem:[#allocation2 + $0x78] sm:$0xff]
        %v814 = vcvt.s32.f32 %v766
        %v815 = vcvt.s32.f32 %v767
        %v816 = vcvt.s32.f32 %v768
        %v817 = vcvt.s32.f32 %v769
        %v818 = vcvt.s32.f32 %v770
        %v819 = vcvt.s32.f32 %v771
        %v820 = vcvt.s32.f32 %v772
        %v821 = vcvt.s32.f32 %v773
        %v822 = vcvt.s32.f32 %v774
        %v823 = vcvt.s32.f32 %v775
        %v824 = vcvt.s32.f32 %v776
        %v825 = vcvt.s32.f32 %v777
        %v826 = vcvt.s32.f32 %v778
        %v827 = vcvt.s32.f32 %v779
        %v828 = vcvt.s32.f32 %v780
        %v829 = vcvt.s32.f32 %v781
        %v830 = vcvt.s32.f32 %v782
        %v831 = vcvt.s32.f32 %v783
        %v832 = vcvt.s32.f32 %v784
        %v833 = vcvt.s32.f32 %v785
        %v834 = vcvt.s32.f32 %v786
        %v835 = vcvt.s32.f32 %v787
        %v836 = vcvt.s32.f32 %v788
        %v837 = vcvt.s32.f32 %v789
        %v838 = vcvt.s32.f32 %v790
        %v839 = vcvt.s32.f32 %v791
        %v840 = vcvt.s32.f32 %v792
        %v841 = vcvt.s32.f32 %v793
        %v842 = vcvt.s32.f32 %v794
        %v843 = vcvt.s32.f32 %v795
        %v844 = vcvt.s32.f32 %v796
        %v845 = vcvt.s32.f32 %v797
        %846 = vmatprep.subr.mxu0 0.0
        %847 = vmatpush1.msra.mxu0 %v215
        %848 = vmatprep.subr.mxu0 0.0
        %849 = vmatpush1.msra.mxu0 %v216
        %850 = vmatprep.subr.mxu0 0.0
        %851 = vmatpush1.msra.mxu0 %v217
        %852 = vmatprep.subr.mxu0 0.0
        %853 = vmatpush1.msra.mxu0 %v218
        %854 = vmatprep.subr.mxu0 0.0
        %855 = vmatpush1.msra.mxu0 %v219
        %856 = vmatprep.subr.mxu0 0.0
        %857 = vmatpush1.msra.mxu0 %v220
        %858 = vmatprep.subr.mxu0 0.0
        %859 = vmatpush1.msra.mxu0 %v221
        %860 = vmatprep.subr.mxu0 0.0
        %861 = vmatpush1.msra.mxu0 %v222
        %862 = vmatprep.subr.mxu0 0.0
        %863 = vmatpush1.msra.mxu0 %v223
        %864 = vmatprep.subr.mxu0 0.0
        %865 = vmatpush1.msra.mxu0 %v224
        %866 = vmatprep.subr.mxu0 0.0
        %867 = vmatpush1.msra.mxu0 %v225
        %868 = vmatprep.subr.mxu0 0.0
        %869 = vmatpush1.msra.mxu0 %v226
        %870 = vmatprep.subr.mxu0 0.0
        %871 = vmatpush1.msra.mxu0 %v227
        %872 = vmatprep.subr.mxu0 0.0
        %873 = vmatpush1.msra.mxu0 %v228
        %874 = vmatprep.subr.mxu0 0.0
        %875 = vmatpush1.msra.mxu0 %v229
        %876 = vmatprep.subr.mxu0 0.0
        %877 = vmatpush1.msra.mxu0 %v230
        %878 = vmatprep.subr.mxu0 0.0
        %879 = vmatpush1.msra.mxu0 %v231
        %880 = vmatprep.subr.mxu0 0.0
        %881 = vmatpush1.msra.mxu0 %v232
        %882 = vmatprep.subr.mxu0 0.0
        %883 = vmatpush1.msra.mxu0 %v233
        %884 = vmatprep.subr.mxu0 0.0
        %885 = vmatpush1.msra.mxu0 %v234
        %886 = vmatprep.subr.mxu0 0.0
        %887 = vmatpush1.msra.mxu0 %v235
        %888 = vmatprep.subr.mxu0 0.0
        %889 = vmatpush1.msra.mxu0 %v236
        %890 = vmatprep.subr.mxu0 0.0
        %891 = vmatpush1.msra.mxu0 %v237
        %892 = vmatprep.subr.mxu0 0.0
        %893 = vmatpush1.msra.mxu0 %v238
        %894 = vmatprep.subr.mxu0 0.0
        %895 = vmatpush1.msra.mxu0 %v239
        %896 = vmatprep.subr.mxu0 0.0
        %897 = vmatpush1.msra.mxu0 %v240
        %898 = vmatprep.subr.mxu0 0.0
        %899 = vmatpush1.msra.mxu0 %v241
        %900 = vmatprep.subr.mxu0 0.0
        %901 = vmatpush1.msra.mxu0 %v242
        %902 = vmatprep.subr.mxu0 0.0
        %903 = vmatpush1.msra.mxu0 %v243
        %904 = vmatprep.subr.mxu0 0.0
        %905 = vmatpush1.msra.mxu0 %v244
        %906 = vmatprep.subr.mxu0 0.0
        %907 = vmatpush1.msra.mxu0 %v245
        %908 = vmatprep.subr.mxu0 0.0
        %909 = vmatpush1.msra.mxu0 %v246
        %910 = vmatprep.mubr.f32.mxu0 %v815
        %911 = vmatmul.mubr.f32.gmra.mrb[0].mxu0 %v814
        %v912 = vpop.f32.mrb[0].mxu0
        %v913 = vadd.f32 0.0, %v912
        %v914 = vpop.f32.mrb[0].mxu0
        %915 = vmatprep.mubr.f32.mxu0 %v817
        %916 = vmatmul.mubr.f32.gmra.mrb[0].mxu0 %v816
        %v917 = vpop.f32.mrb[0].mxu0
        %v918 = vadd.f32 0.0, %v917
        %v919 = vpop.f32.mrb[0].mxu0
        %920 = vmatprep.mubr.f32.mxu0 %v819
        %921 = vmatmul.mubr.f32.gmra.mrb[0].mxu0 %v818
        %v922 = vpop.f32.mrb[0].mxu0
        %v923 = vadd.f32 0.0, %v922
        %v924 = vpop.f32.mrb[0].mxu0
        %925 = vmatprep.mubr.f32.mxu0 %v821
        %926 = vmatmul.mubr.f32.gmra.mrb[0].mxu0 %v820
        %v927 = vpop.f32.mrb[0].mxu0
        %v928 = vadd.f32 0.0, %v927
        %v929 = vpop.f32.mrb[0].mxu0
        %930 = vmatprep.mubr.f32.mxu0 %v823
        %931 = vmatmul.mubr.f32.gmra.mrb[0].mxu0 %v822
        %v932 = vpop.f32.mrb[0].mxu0
        %v933 = vadd.f32 0.0, %v932
        %v934 = vpop.f32.mrb[0].mxu0
        %935 = vmatprep.mubr.f32.mxu0 %v825
        %936 = vmatmul.mubr.f32.gmra.mrb[0].mxu0 %v824
        %v937 = vpop.f32.mrb[0].mxu0
        %v938 = vadd.f32 0.0, %v937
        %v939 = vpop.f32.mrb[0].mxu0
        %940 = vmatprep.mubr.f32.mxu0 %v827
        %941 = vmatmul.mubr.f32.gmra.mrb[0].mxu0 %v826
        %v942 = vpop.f32.mrb[0].mxu0
        %v943 = vadd.f32 0.0, %v942
        %v944 = vpop.f32.mrb[0].mxu0
        %945 = vmatprep.mubr.f32.mxu0 %v829
        %946 = vmatmul.mubr.f32.gmra.mrb[0].mxu0 %v828
        %v947 = vpop.f32.mrb[0].mxu0
        %v948 = vadd.f32 0.0, %v947
        %v949 = vpop.f32.mrb[0].mxu0
        %950 = vmatprep.mubr.f32.mxu0 %v831
        %951 = vmatmul.mubr.f32.gmra.mrb[0].mxu0 %v830
        %v952 = vpop.f32.mrb[0].mxu0
        %v953 = vadd.f32 0.0, %v952
        %v954 = vpop.f32.mrb[0].mxu0
        %955 = vmatprep.mubr.f32.mxu0 %v833
        %956 = vmatmul.mubr.f32.gmra.mrb[0].mxu0 %v832
        %v957 = vpop.f32.mrb[0].mxu0
        %v958 = vadd.f32 0.0, %v957
        %v959 = vpop.f32.mrb[0].mxu0
        %960 = vmatprep.mubr.f32.mxu0 %v835
        %961 = vmatmul.mubr.f32.gmra.mrb[0].mxu0 %v834
        %v962 = vpop.f32.mrb[0].mxu0
        %v963 = vadd.f32 0.0, %v962
        %v964 = vpop.f32.mrb[0].mxu0
        %965 = vmatprep.mubr.f32.mxu0 %v837
        %966 = vmatmul.mubr.f32.gmra.mrb[0].mxu0 %v836
        %v967 = vpop.f32.mrb[0].mxu0
        %v968 = vadd.f32 0.0, %v967
        %v969 = vpop.f32.mrb[0].mxu0
        %970 = vmatprep.mubr.f32.mxu0 %v839
        %971 = vmatmul.mubr.f32.gmra.mrb[0].mxu0 %v838
        %v972 = vpop.f32.mrb[0].mxu0
        %v973 = vadd.f32 0.0, %v972
        %v974 = vpop.f32.mrb[0].mxu0
        %975 = vmatprep.mubr.f32.mxu0 %v841
        %976 = vmatmul.mubr.f32.gmra.mrb[0].mxu0 %v840
        %v977 = vpop.f32.mrb[0].mxu0
        %v978 = vadd.f32 0.0, %v977
        %v979 = vpop.f32.mrb[0].mxu0
        %980 = vmatprep.mubr.f32.mxu0 %v843
        %981 = vmatmul.mubr.f32.gmra.mrb[0].mxu0 %v842
        %v982 = vpop.f32.mrb[0].mxu0
        %v983 = vadd.f32 0.0, %v982
        %v984 = vpop.f32.mrb[0].mxu0
        %985 = vmatprep.mubr.f32.mxu0 %v845
        %986 = vmatmul.mubr.f32.gmra.mrb[0].mxu0 %v844
        %v987 = vpop.f32.mrb[0].mxu0
        %v988 = vadd.f32 0.0, %v987
        %v989 = vpop.f32.mrb[0].mxu0
        %990 = vdwg.mxu0
        %v991 = vadd.f32 %v798, %v913
        %v992 = vadd.f32 %v799, %v918
        %v993 = vadd.f32 %v800, %v923
        %v994 = vadd.f32 %v801, %v928
        %v995 = vadd.f32 %v802, %v933
        %v996 = vadd.f32 %v803, %v938
        %v997 = vadd.f32 %v804, %v943
        %v998 = vadd.f32 %v805, %v948
        %v999 = vadd.f32 %v806, %v953
        %v1000 = vadd.f32 %v807, %v958
        %v1001 = vadd.f32 %v808, %v963
        %v1002 = vadd.f32 %v809, %v968
        %v1003 = vadd.f32 %v810, %v973
        %v1004 = vadd.f32 %v811, %v978
        %v1005 = vadd.f32 %v812, %v983
        %v1006 = vadd.f32 %v813, %v988
        %1007 = vst [vmem:[#allocation2] sm:$0xff] %v991
        %1008 = vst [vmem:[#allocation2 + $0x8] sm:$0xff] %v992
        %1009 = vst [vmem:[#allocation2 + $0x10] sm:$0xff] %v993
        %1010 = vst [vmem:[#allocation2 + $0x18] sm:$0xff] %v994
        %1011 = vst [vmem:[#allocation2 + $0x20] sm:$0xff] %v995
        %1012 = vst [vmem:[#allocation2 + $0x28] sm:$0xff] %v996
        %1013 = vst [vmem:[#allocation2 + $0x30] sm:$0xff] %v997
        %1014 = vst [vmem:[#allocation2 + $0x38] sm:$0xff] %v998
        %1015 = vst [vmem:[#allocation2 + $0x40] sm:$0xff] %v999
        %1016 = vst [vmem:[#allocation2 + $0x48] sm:$0xff] %v1000
        %1017 = vst [vmem:[#allocation2 + $0x50] sm:$0xff] %v1001
        %1018 = vst [vmem:[#allocation2 + $0x58] sm:$0xff] %v1002
        %1019 = vst [vmem:[#allocation2 + $0x60] sm:$0xff] %v1003
        %1020 = vst [vmem:[#allocation2 + $0x68] sm:$0xff] %v1004
        %1021 = vst [vmem:[#allocation2 + $0x70] sm:$0xff] %v1005
        %1022 = vst [vmem:[#allocation2 + $0x78] sm:$0xff] %v1006
        // Predicated region
        $region33: #{tpu_custom_call.1} parent=27 // pred_check
          %p1023 = pneg %p179
        $region34: #{tpu_custom_call.1} parent=27 // pred_check_branch
          %1025 = sbr.rel (%p1023) target = $region36
        $region35: #{tpu_custom_call.1} parent=27 // pred_region
          %v1026 = vld [vmem:[#allocation2] sm:$0xff]
          %v1027 = vld [vmem:[#allocation2 + $0x8] sm:$0xff]
          %v1028 = vld [vmem:[#allocation2 + $0x10] sm:$0xff]
          %v1029 = vld [vmem:[#allocation2 + $0x18] sm:$0xff]
          %v1030 = vld [vmem:[#allocation2 + $0x20] sm:$0xff]
          %v1031 = vld [vmem:[#allocation2 + $0x28] sm:$0xff]
          %v1032 = vld [vmem:[#allocation2 + $0x30] sm:$0xff]
          %v1033 = vld [vmem:[#allocation2 + $0x38] sm:$0xff]
          %v1034 = vld [vmem:[#allocation2 + $0x40] sm:$0xff]
          %v1035 = vld [vmem:[#allocation2 + $0x48] sm:$0xff]
          %v1036 = vld [vmem:[#allocation2 + $0x50] sm:$0xff]
          %v1037 = vld [vmem:[#allocation2 + $0x58] sm:$0xff]
          %v1038 = vld [vmem:[#allocation2 + $0x60] sm:$0xff]
          %v1039 = vld [vmem:[#allocation2 + $0x68] sm:$0xff]
          %v1040 = vld [vmem:[#allocation2 + $0x70] sm:$0xff]
          %v1041 = vld [vmem:[#allocation2 + $0x78] sm:$0xff]
          %v1042 = vmul.f32 %v1026, 0.25
          %v1043 = vmul.f32 %v1027, 0.25
          %v1044 = vmul.f32 %v1028, 0.25
          %v1045 = vmul.f32 %v1029, 0.25
          %v1046 = vmul.f32 %v1030, 0.25
          %v1047 = vmul.f32 %v1031, 0.25
          %v1048 = vmul.f32 %v1032, 0.25
          %v1049 = vmul.f32 %v1033, 0.25
          %v1050 = vmul.f32 %v1034, 0.25
          %v1051 = vmul.f32 %v1035, 0.25
          %v1052 = vmul.f32 %v1036, 0.25
          %v1053 = vmul.f32 %v1037, 0.25
          %v1054 = vmul.f32 %v1038, 0.25
          %v1055 = vmul.f32 %v1039, 0.25
          %v1056 = vmul.f32 %v1040, 0.25
          %v1057 = vmul.f32 %v1041, 0.25
          %1058 = vst [vmem:[%s165] sm:$0xff] %v1042
          %1059 = vst [vmem:[%s165 + $0x8] sm:$0xff] %v1043
          %1060 = vst [vmem:[%s165 + $0x10] sm:$0xff] %v1044
          %1061 = vst [vmem:[%s165 + $0x18] sm:$0xff] %v1045
          %1062 = vst [vmem:[%s165 + $0x20] sm:$0xff] %v1046
          %1063 = vst [vmem:[%s165 + $0x28] sm:$0xff] %v1047
          %1064 = vst [vmem:[%s165 + $0x30] sm:$0xff] %v1048
          %1065 = vst [vmem:[%s165 + $0x38] sm:$0xff] %v1049
          %1066 = vst [vmem:[%s165 + $0x40] sm:$0xff] %v1050
          %1067 = vst [vmem:[%s165 + $0x48] sm:$0xff] %v1051
          %1068 = vst [vmem:[%s165 + $0x50] sm:$0xff] %v1052
          %1069 = vst [vmem:[%s165 + $0x58] sm:$0xff] %v1053
          %1070 = vst [vmem:[%s165 + $0x60] sm:$0xff] %v1054
          %1071 = vst [vmem:[%s165 + $0x68] sm:$0xff] %v1055
          %1072 = vst [vmem:[%s165 + $0x70] sm:$0xff] %v1056
          %1073 = vst [vmem:[%s165 + $0x78] sm:$0xff] %v1057
        $region36: #{tpu_custom_call.1} parent=27 // pred_fallthru
          _
        %s1074 = sand.u32 %s88, 1
        %s1075 = scalar_lea.sflag [#allocation4], %s1074
        %s1076 = sand.u32 %s88, 1
        %s1077 = smul.addr %s1076, 128
        %s1078 = scalar_lea.vmem [#allocation3], %s1077
        // Predicated region
        $region37: #{tpu_custom_call.1} parent=27 // pred_check
          %p1079 = pneg %p98
        $region38: #{tpu_custom_call.1} parent=27 // pred_check_branch
          %1081 = sbr.rel (%p1079) target = $region40
        $region39: #{tpu_custom_call.1} parent=27 // pred_region
          %s1082 = smul.u32 16, %s20
          %s1084 = ssub.s32 2048, 2048
          %1085 = vsyncadd %s1075, %s1084
          %s1086 = smul.addr %s1082, 128
          %s1087 = scalar_lea.hbm %s2, %s1086
          %s1088 = sshll.u32 %s1078, 4
          %s1089 = int_to_ptr.vmem [resolvable:$true] %s1088
          %1094 = dma.vmem_to_hbm [thread:$0]  %s1089, 2048, %s1087, %s1075, 128, 128, 8
        $region40: #{tpu_custom_call.1} parent=27 // pred_fallthru
          _
      $region28: #{tpu_custom_call.1} parent=5 // pred_fallthru
        _
      %p1095 = scmp.le.s32.totalorder 2, %s11
      // Predicated region
      $region41: #{tpu_custom_call.1} parent=5 // pred_check
        %p1096 = pneg %p1095
      $region42: #{tpu_custom_call.1} parent=5 // pred_check_branch
        %1098 = sbr.rel (%p1096) target = $region44
      $region43: #{tpu_custom_call.1} parent=5 // pred_region
        %s1099 = ssub.s32 %s11, 2
        // Predicated region
        $region45: #{tpu_custom_call.1} parent=43 // pred_check
          %p1100 = pneg %p104
        $region46: #{tpu_custom_call.1} parent=43 // pred_check_branch
          %1102 = sbr.rel (%p1100) target = $region48
        $region47: #{tpu_custom_call.1} parent=43 // pred_region
          %s1103 = sand.u32 %s89, 1
          %s1104 = scalar_lea.sflag [#allocation4], %s1103
          %s1105 = sand.u32 %s89, 1
          %s1106 = smul.addr %s1105, 128
          %s1107 = scalar_lea.vmem [#allocation3], %s1106
          %1108 = dma.done %s1104, 2048
        $region48: #{tpu_custom_call.1} parent=43 // pred_fallthru
          _
      $region44: #{tpu_custom_call.1} parent=5 // pred_fallthru
        _
    $region6: #{tpu_custom_call.1} parent=1 // loop_footer
      %s15 = sadd.s32 1, %s11
    $region7: #{tpu_custom_call.1} parent=1 // loop_footer_branch
      %10 = sbr.rel target = $region3
    $region8: #{tpu_custom_call.1} parent=1 // loop_exit
      _
    %1109 = vsyncpa [#allocation4], 1
    %s1110 = scalar_lea.sflag [#allocation4], 1
    %1111 = vsyncpa %s1110, 1

// kernel: tpu_custom_call.1
$region0: #{tpu_custom_call.1}
  #allocation0 [shape = 'u32[]', space=smem, size = 0x4, offset = 0x4, fixed_abs, tag = 'smem constant byte address 0x4 - core index']
  #allocation1 [shape = 'u32[144,128]{1,0:T(1,128)}', space=vmem, size = 0x12000, scoped, tag = 'internal scratch']
  #allocation2 [shape = 'f32[128,128]{1,0:T(8,128)}', space=vmem, size = 0x10000, scoped, tag = 'scratch operand']
  %s0 = inlined_call_operand.vmem [shape: s32[256,4], index: 0, kind: input, shape index: {}]
  %s1 = inlined_call_operand.vmem [shape: f32[256,128], index: 1, kind: input, shape index: {}]
  %s2 = inlined_call_operand.hbm [shape: f32[256,128], index: 2, kind: output, shape index: {}]
  %s3 = sld [smem:[#allocation0]]
  $region49: #{tpu_custom_call.1} parent=0
    _
  %s5 = ssub.s32 1, %s3
  %s6 = scalar_select 0, %s5, %s3
  $region1: #{tpu_custom_call.1} parent=0
    #allocation3 [shape = 'u8[131072]{0}', space=vmem, size = 0x20000, scoped, tag = 'output window, operand 0']
    #allocation4 [shape = 's32[2]{0}', space=sflag, size = 0x8, scoped, tag = 'scoped memory for tpu_custom_call.1']
    %7 = vsyncpa [#allocation4], 0
    %s8 = scalar_lea.sflag [#allocation4], 1
    %9 = vsyncpa %s8, 0
    loop: start=0, step=1, limit=4
    $region2: #{tpu_custom_call.1} parent=1 // loop_pre_header
      _
    $region3: #{tpu_custom_call.1} parent=1 // loop_header
      %s11 = sphi 0, %s15
      %p12 = scmp.ge.s32.totalorder %s11, 4
      %s18 = sphi 0, %s30
      %s19 = sphi 0, %s26
      %s20 = sphi 0, %s18
      %s21 = sphi 0, %s19
      %s22 = sphi 0, %s20
      %s23 = sphi 0, %s21
      %s33 = sphi 0, %s35
      %s36 = sphi 0, %s33
      %s37 = sphi 0, %s36
      %s53 = sphi 0, %s37
      %s59 = sphi 0, %s61
      %s62 = sphi 0, %s59
      %s63 = sphi 0, %s62
      %s79 = sphi 0, %s63
      %s85 = sphi 0, %s87
      %s88 = sphi 0, %s85
      %s89 = sphi 0, %s88
      %s105 = sphi 0, %s89
    $region4: #{tpu_custom_call.1} parent=1 // loop_header_branch
      %14 = sbr.rel (%p12) target = $region8
    $region5: #{tpu_custom_call.1} parent=1 // loop_body
      %s16 = ssub.s32 %s11, 1
      %s17 = ssub.s32 %s11, 2
      %s24 = sadd.s32 1, %s19
      %p25 = scmp.ge.s32.totalorder %s24, 1
      %s26 = scalar_select %p25, 0, %s24
      %s27 = sadd.s32 1, %s18
      %s28 = scalar_select %p25, %s27, %s18
      %p29 = scmp.ge.s32.totalorder %s28, 2
      %s30 = scalar_select %p29, 0, %s28
      %s31 = ssub.s32 %s18, %s30
      %p32 = scmp.eq.s32.totalorder %s31, 0
      %s34 = sadd.s32 %s33, 1
      %s35 = scalar_select %p32, %s33, %s34
      %p38 = pneg %p32
      %p39 = scmp.eq.s32.totalorder %s11, 1
      %p40 = por %p38, %p39
      %p41 = scmp.ne.s32.totalorder %s33, %s36
      %p42 = scmp.eq.s32.totalorder %s11, 0
      %p43 = por %p41, %p42
      %p44 = scmp.ne.s32.totalorder %s33, %s36
      %p45 = scmp.eq.s32.totalorder %s16, 1
      %p46 = por %p44, %p45
      %p47 = scmp.ne.s32.totalorder %s36, %s37
      %p48 = scmp.eq.s32.totalorder %s16, 0
      %p49 = por %p47, %p48
      %p50 = scmp.ne.s32.totalorder %s36, %s37
      %p51 = scmp.eq.s32.totalorder %s17, 1
      %p52 = por %p50, %p51
      %p54 = scmp.ne.s32.totalorder %s37, %s53
      %p55 = scmp.eq.s32.totalorder %s17, 0
      %p56 = por %p54, %p55
      %s57 = ssub.s32 %s19, %s26
      %p58 = scmp.eq.s32.totalorder %s57, 0
      %s60 = sadd.s32 %s59, 1
      %s61 = scalar_select %p58, %s59, %s60
      %p64 = pneg %p58
      %p65 = scmp.eq.s32.totalorder %s11, 1
      %p66 = por %p64, %p65
      %p67 = scmp.ne.s32.totalorder %s59, %s62
      %p68 = scmp.eq.s32.totalorder %s11, 0
      %p69 = por %p67, %p68
      %p70 = scmp.ne.s32.totalorder %s59, %s62
      %p71 = scmp.eq.s32.totalorder %s16, 1
      %p72 = por %p70, %p71
      %p73 = scmp.ne.s32.totalorder %s62, %s63
      %p74 = scmp.eq.s32.totalorder %s16, 0
      %p75 = por %p73, %p74
      %p76 = scmp.ne.s32.totalorder %s62, %s63
      %p77 = scmp.eq.s32.totalorder %s17, 1
      %p78 = por %p76, %p77
      %p80 = scmp.ne.s32.totalorder %s63, %s79
      %p81 = scmp.eq.s32.totalorder %s17, 0
      %p82 = por %p80, %p81
      %s83 = ssub.s32 %s18, %s30
      %p84 = scmp.eq.s32.totalorder %s83, 0
      %s86 = sadd.s32 %s85, 1
      %s87 = scalar_select %p84, %s85, %s86
      %p90 = pneg %p84
      %p91 = scmp.eq.s32.totalorder %s11, 1
      %p92 = por %p90, %p91
      %p93 = scmp.ne.s32.totalorder %s85, %s88
      %p94 = scmp.eq.s32.totalorder %s11, 0
      %p95 = por %p93, %p94
      %p96 = scmp.ne.s32.totalorder %s85, %s88
      %p97 = scmp.eq.s32.totalorder %s16, 1
      %p98 = por %p96, %p97
      %p99 = scmp.ne.s32.totalorder %s88, %s89
      %p100 = scmp.eq.s32.totalorder %s16, 0
      %p101 = por %p99, %p100
      %p102 = scmp.ne.s32.totalorder %s88, %s89
      %p103 = scmp.eq.s32.totalorder %s17, 1
      %p104 = por %p102, %p103
      %p106 = scmp.ne.s32.totalorder %s89, %s105
      %p107 = scmp.eq.s32.totalorder %s17, 0
      %p108 = por %p106, %p107
      %p109 = scmp.le.s32.totalorder 1, %s11
      %p110 = scmp.lt.s32.totalorder %s11, 3
      %p111 = pnand %p109, %p110
      %p112 = pneg %p111
      // Predicated region
      $region9: #{tpu_custom_call.1} parent=5 // pred_check
        _
      $region10: #{tpu_custom_call.1} parent=5 // pred_check_branch
        %114 = sbr.rel (%p111) target = $region12
      $region11: #{tpu_custom_call.1} parent=5 // pred_region
        %s115 = ssub.s32 %s11, 1
        // Predicated region
        $region13: #{tpu_custom_call.1} parent=11 // pred_check
          %p116 = pneg %p75
        $region14: #{tpu_custom_call.1} parent=11 // pred_check_branch
          %118 = sbr.rel (%p116) target = $region16
        $region15: #{tpu_custom_call.1} parent=11 // pred_region
          %s119 = smul.u32 32, %s21
          %p120 = scmp.lt.s32.totalorder %s119, 31
          %s121 = scalar_select %p120, %s119, 31
          %s122 = smul.addr %s121, 8
          %s123 = scalar_lea.vmem %s1, %s122
          %s124 = smul.u32 32, %s21
        $region16: #{tpu_custom_call.1} parent=11 // pred_fallthru
          _
      $region12: #{tpu_custom_call.1} parent=5 // pred_fallthru
        _
      %p125 = scmp.lt.s32.totalorder %s11, 2
      // Predicated region
      $region17: #{tpu_custom_call.1} parent=5 // pred_check
        %p126 = pneg %p125
      $region18: #{tpu_custom_call.1} parent=5 // pred_check_branch
        %128 = sbr.rel (%p126) target = $region20
      $region19: #{tpu_custom_call.1} parent=5 // pred_region
        // Predicated region
        $region21: #{tpu_custom_call.1} parent=19 // pred_check
          %p129 = pneg %p43
        $region22: #{tpu_custom_call.1} parent=19 // pred_check_branch
          %131 = sbr.rel (%p129) target = $region24
        $region23: #{tpu_custom_call.1} parent=19 // pred_region
          %s132 = smul.u32 16, %s18
          %p133 = scmp.lt.s32.totalorder %s132, 31
          %s134 = scalar_select %p133, %s132, 31
          %s135 = smul.addr %s134, 8
          %s136 = scalar_lea.vmem %s0, %s135
          %s137 = smul.u32 16, %s18
        $region24: #{tpu_custom_call.1} parent=19 // pred_fallthru
          _
      $region20: #{tpu_custom_call.1} parent=5 // pred_fallthru
        _
      %p138 = scmp.le.s32.totalorder 1, %s11
      %p139 = scmp.lt.s32.totalorder %s11, 3
      %p140 = pnand %p138, %p139
      %p141 = pneg %p140
      // Predicated region
      $region25: #{tpu_custom_call.1} parent=5 // pred_check
        _
      $region26: #{tpu_custom_call.1} parent=5 // pred_check_branch
        %143 = sbr.rel (%p140) target = $region28
      $region27: #{tpu_custom_call.1} parent=5 // pred_region
        %s144 = ssub.s32 %s11, 1
        %s145 = smul.u32 16, %s20
        %p146 = scmp.lt.s32.totalorder %s145, 31
        %s147 = scalar_select %p146, %s145, 31
        %s148 = smul.addr %s147, 8
        %s149 = scalar_lea.vmem %s0, %s148
        %p150 = pneg %p49
        %p151 = pneg %p46
        %s152 = smul.u32 32, %s21
        %p153 = scmp.lt.s32.totalorder %s152, 31
        %s154 = scalar_select %p153, %s152, 31
        %s155 = smul.addr %s154, 8
        %s156 = scalar_lea.vmem %s1, %s155
        %p157 = pneg %p75
        %p158 = pneg %p72
        %p159 = pneg %p101
        %p160 = pneg %p98
        %s161 = sand.u32 %s88, 1
        %s162 = scalar_lea.sflag [#allocation4], %s161
        %s163 = sand.u32 %s88, 1
        %s164 = smul.addr %s163, 128
        %s165 = scalar_lea.vmem [#allocation3], %s164
        %s166 = smul.u32 16, %s20
        %p167 = scmp.lt.s32.totalorder %s166, 31
        %s168 = scalar_select %p167, %s166, 31
        %s169 = smul.addr %s168, 8
        %s170 = scalar_lea.vmem %s0, %s169
        %s171 = smul.u32 16, %s20
        %s172 = smul.u32 32, %s21
        %p173 = scmp.lt.s32.totalorder %s172, 31
        %s174 = scalar_select %p173, %s172, 31
        %s175 = smul.addr %s174, 8
        %s176 = scalar_lea.vmem %s1, %s175
        %s177 = smul.u32 32, %s21
        %s178 = smul.u32 16, %s20
        %p179 = scmp.eq.s32.totalorder %s21, 0
        // Predicated region
        $region29: #{tpu_custom_call.1} parent=27 // pred_check
          %p180 = pneg %p179
        $region30: #{tpu_custom_call.1} parent=27 // pred_check_branch
          %182 = sbr.rel (%p180) target = $region32
        $region31: #{tpu_custom_call.1} parent=27 // pred_region
          %183 = vst [vmem:[#allocation2] sm:$0xff] 0.0
          %184 = vst [vmem:[#allocation2 + $0x8] sm:$0xff] 0.0
          %185 = vst [vmem:[#allocation2 + $0x10] sm:$0xff] 0.0
          %186 = vst [vmem:[#allocation2 + $0x18] sm:$0xff] 0.0
          %187 = vst [vmem:[#allocation2 + $0x20] sm:$0xff] 0.0
          %188 = vst [vmem:[#allocation2 + $0x28] sm:$0xff] 0.0
          %189 = vst [vmem:[#allocation2 + $0x30] sm:$0xff] 0.0
          %190 = vst [vmem:[#allocation2 + $0x38] sm:$0xff] 0.0
          %191 = vst [vmem:[#allocation2 + $0x40] sm:$0xff] 0.0
          %192 = vst [vmem:[#allocation2 + $0x48] sm:$0xff] 0.0
          %193 = vst [vmem:[#allocation2 + $0x50] sm:$0xff] 0.0
          %194 = vst [vmem:[#allocation2 + $0x58] sm:$0xff] 0.0
          %195 = vst [vmem:[#allocation2 + $0x60] sm:$0xff] 0.0
          %196 = vst [vmem:[#allocation2 + $0x68] sm:$0xff] 0.0
          %197 = vst [vmem:[#allocation2 + $0x70] sm:$0xff] 0.0
          %198 = vst [vmem:[#allocation2 + $0x78] sm:$0xff] 0.0
        $region32: #{tpu_custom_call.1} parent=27 // pred_fallthru
          _
        %v199 = vld [vmem:[%s170] sm:$0xff]
        %v200 = vld [vmem:[%s170 + $0x8] sm:$0xff]
        %v201 = vld [vmem:[%s170 + $0x10] sm:$0xff]
        %v202 = vld [vmem:[%s170 + $0x18] sm:$0xff]
        %v203 = vld [vmem:[%s170 + $0x20] sm:$0xff]
        %v204 = vld [vmem:[%s170 + $0x28] sm:$0xff]
        %v205 = vld [vmem:[%s170 + $0x30] sm:$0xff]
        %v206 = vld [vmem:[%s170 + $0x38] sm:$0xff]
        %v207 = vld [vmem:[%s170 + $0x40] sm:$0xff]
        %v208 = vld [vmem:[%s170 + $0x48] sm:$0xff]
        %v209 = vld [vmem:[%s170 + $0x50] sm:$0xff]
        %v210 = vld [vmem:[%s170 + $0x58] sm:$0xff]
        %v211 = vld [vmem:[%s170 + $0x60] sm:$0xff]
        %v212 = vld [vmem:[%s170 + $0x68] sm:$0xff]
        %v213 = vld [vmem:[%s170 + $0x70] sm:$0xff]
        %v214 = vld [vmem:[%s170 + $0x78] sm:$0xff]
        %v215 = vld [vmem:[%s176] sm:$0xff]
        %v216 = vld [vmem:[%s176 + $0x8] sm:$0xff]
        %v217 = vld [vmem:[%s176 + $0x10] sm:$0xff]
        %v218 = vld [vmem:[%s176 + $0x18] sm:$0xff]
        %v219 = vld [vmem:[%s176 + $0x20] sm:$0xff]
        %v220 = vld [vmem:[%s176 + $0x28] sm:$0xff]
        %v221 = vld [vmem:[%s176 + $0x30] sm:$0xff]
        %v222 = vld [vmem:[%s176 + $0x38] sm:$0xff]
        %v223 = vld [vmem:[%s176 + $0x40] sm:$0xff]
        %v224 = vld [vmem:[%s176 + $0x48] sm:$0xff]
        %v225 = vld [vmem:[%s176 + $0x50] sm:$0xff]
        %v226 = vld [vmem:[%s176 + $0x58] sm:$0xff]
        %v227 = vld [vmem:[%s176 + $0x60] sm:$0xff]
        %v228 = vld [vmem:[%s176 + $0x68] sm:$0xff]
        %v229 = vld [vmem:[%s176 + $0x70] sm:$0xff]
        %v230 = vld [vmem:[%s176 + $0x78] sm:$0xff]
        %v231 = vld [vmem:[%s176 + $0x80] sm:$0xff]
        %v232 = vld [vmem:[%s176 + $0x88] sm:$0xff]
        %v233 = vld [vmem:[%s176 + $0x90] sm:$0xff]
        %v234 = vld [vmem:[%s176 + $0x98] sm:$0xff]
        %v235 = vld [vmem:[%s176 + $0xa0] sm:$0xff]
        %v236 = vld [vmem:[%s176 + $0xa8] sm:$0xff]
        %v237 = vld [vmem:[%s176 + $0xb0] sm:$0xff]
        %v238 = vld [vmem:[%s176 + $0xb8] sm:$0xff]
        %v239 = vld [vmem:[%s176 + $0xc0] sm:$0xff]
        %v240 = vld [vmem:[%s176 + $0xc8] sm:$0xff]
        %v241 = vld [vmem:[%s176 + $0xd0] sm:$0xff]
        %v242 = vld [vmem:[%s176 + $0xd8] sm:$0xff]
        %v243 = vld [vmem:[%s176 + $0xe0] sm:$0xff]
        %v244 = vld [vmem:[%s176 + $0xe8] sm:$0xff]
        %v245 = vld [vmem:[%s176 + $0xf0] sm:$0xff]
        %v246 = vld [vmem:[%s176 + $0xf8] sm:$0xff]
        %v247 = vlaneseq
        %v248 = vand.u32 %v247, 127
        %v249 = vadd.s32 %v248, 128
        %s250 = smul.u32 %s21, 256
        %v251 = vstv %s250
        %v252 = vadd.s32 %v248, %v251
        %v253 = vadd.s32 %v249, %v251
        %254 = vset.pattern.permute.xlu0 0
        %255 = vperm.xlu0 %254, %v199
        %v256 = vpop.permute.xlu0 %255
        %257 = vset.pattern.permute.xlu0 0
        %258 = vperm.xlu0 %257, %v200
        %v259 = vpop.permute.xlu0 %258
        %260 = vset.pattern.permute.xlu0 0
        %261 = vperm.xlu0 %260, %v201
        %v262 = vpop.permute.xlu0 %261
        %263 = vset.pattern.permute.xlu0 0
        %264 = vperm.xlu0 %263, %v202
        %v265 = vpop.permute.xlu0 %264
        %266 = vset.pattern.permute.xlu0 0
        %267 = vperm.xlu0 %266, %v203
        %v268 = vpop.permute.xlu0 %267
        %269 = vset.pattern.permute.xlu0 0
        %270 = vperm.xlu0 %269, %v204
        %v271 = vpop.permute.xlu0 %270
        %272 = vset.pattern.permute.xlu0 0
        %273 = vperm.xlu0 %272, %v205
        %v274 = vpop.permute.xlu0 %273
        %275 = vset.pattern.permute.xlu0 0
        %276 = vperm.xlu0 %275, %v206
        %v277 = vpop.permute.xlu0 %276
        %278 = vset.pattern.permute.xlu0 0
        %279 = vperm.xlu0 %278, %v207
        %v280 = vpop.permute.xlu0 %279
        %281 = vset.pattern.permute.xlu0 0
        %282 = vperm.xlu0 %281, %v208
        %v283 = vpop.permute.xlu0 %282
        %284 = vset.pattern.permute.xlu0 0
        %285 = vperm.xlu0 %284, %v209
        %v286 = vpop.permute.xlu0 %285
        %287 = vset.pattern.permute.xlu0 0
        %288 = vperm.xlu0 %287, %v210
        %v289 = vpop.permute.xlu0 %288
        %290 = vset.pattern.permute.xlu0 0
        %291 = vperm.xlu0 %290, %v211
        %v292 = vpop.permute.xlu0 %291
        %293 = vset.pattern.permute.xlu0 0
        %294 = vperm.xlu0 %293, %v212
        %v295 = vpop.permute.xlu0 %294
        %296 = vset.pattern.permute.xlu0 0
        %297 = vperm.xlu0 %296, %v213
        %v298 = vpop.permute.xlu0 %297
        %299 = vset.pattern.permute.xlu0 0
        %300 = vperm.xlu0 %299, %v214
        %v301 = vpop.permute.xlu0 %300
        %vm302 = vcmp.eq.s32.totalorder %v256, %v252
        %vm303 = vcmp.eq.s32.totalorder %v256, %v253
        %vm304 = vcmp.eq.s32.totalorder %v259, %v252
        %vm305 = vcmp.eq.s32.totalorder %v259, %v253
        %vm306 = vcmp.eq.s32.totalorder %v262, %v252
        %vm307 = vcmp.eq.s32.totalorder %v262, %v253
        %vm308 = vcmp.eq.s32.totalorder %v265, %v252
        %vm309 = vcmp.eq.s32.totalorder %v265, %v253
        %vm310 = vcmp.eq.s32.totalorder %v268, %v252
        %vm311 = vcmp.eq.s32.totalorder %v268, %v253
        %vm312 = vcmp.eq.s32.totalorder %v271, %v252
        %vm313 = vcmp.eq.s32.totalorder %v271, %v253
        %vm314 = vcmp.eq.s32.totalorder %v274, %v252
        %vm315 = vcmp.eq.s32.totalorder %v274, %v253
        %vm316 = vcmp.eq.s32.totalorder %v277, %v252
        %vm317 = vcmp.eq.s32.totalorder %v277, %v253
        %vm318 = vcmp.eq.s32.totalorder %v280, %v252
        %vm319 = vcmp.eq.s32.totalorder %v280, %v253
        %vm320 = vcmp.eq.s32.totalorder %v283, %v252
        %vm321 = vcmp.eq.s32.totalorder %v283, %v253
        %vm322 = vcmp.eq.s32.totalorder %v286, %v252
        %vm323 = vcmp.eq.s32.totalorder %v286, %v253
        %vm324 = vcmp.eq.s32.totalorder %v289, %v252
        %vm325 = vcmp.eq.s32.totalorder %v289, %v253
        %vm326 = vcmp.eq.s32.totalorder %v292, %v252
        %vm327 = vcmp.eq.s32.totalorder %v292, %v253
        %vm328 = vcmp.eq.s32.totalorder %v295, %v252
        %vm329 = vcmp.eq.s32.totalorder %v295, %v253
        %vm330 = vcmp.eq.s32.totalorder %v298, %v252
        %vm331 = vcmp.eq.s32.totalorder %v298, %v253
        %vm332 = vcmp.eq.s32.totalorder %v301, %v252
        %vm333 = vcmp.eq.s32.totalorder %v301, %v253
        %v334 = vsel %vm302, 1, 0
        %v335 = vsel %vm303, 1, 0
        %v336 = vsel %vm304, 1, 0
        %v337 = vsel %vm305, 1, 0
        %v338 = vsel %vm306, 1, 0
        %v339 = vsel %vm307, 1, 0
        %v340 = vsel %vm308, 1, 0
        %v341 = vsel %vm309, 1, 0
        %v342 = vsel %vm310, 1, 0
        %v343 = vsel %vm311, 1, 0
        %v344 = vsel %vm312, 1, 0
        %v345 = vsel %vm313, 1, 0
        %v346 = vsel %vm314, 1, 0
        %v347 = vsel %vm315, 1, 0
        %v348 = vsel %vm316, 1, 0
        %v349 = vsel %vm317, 1, 0
        %v350 = vsel %vm318, 1, 0
        %v351 = vsel %vm319, 1, 0
        %v352 = vsel %vm320, 1, 0
        %v353 = vsel %vm321, 1, 0
        %v354 = vsel %vm322, 1, 0
        %v355 = vsel %vm323, 1, 0
        %v356 = vsel %vm324, 1, 0
        %v357 = vsel %vm325, 1, 0
        %v358 = vsel %vm326, 1, 0
        %v359 = vsel %vm327, 1, 0
        %v360 = vsel %vm328, 1, 0
        %v361 = vsel %vm329, 1, 0
        %v362 = vsel %vm330, 1, 0
        %v363 = vsel %vm331, 1, 0
        %v364 = vsel %vm332, 1, 0
        %v365 = vsel %vm333, 1, 0
        %366 = vset.pattern.permute.xlu0 1
        %367 = vperm.xlu0 %366, %v199
        %v368 = vpop.permute.xlu0 %367
        %369 = vset.pattern.permute.xlu0 1
        %370 = vperm.xlu0 %369, %v200
        %v371 = vpop.permute.xlu0 %370
        %372 = vset.pattern.permute.xlu0 1
        %373 = vperm.xlu0 %372, %v201
        %v374 = vpop.permute.xlu0 %373
        %375 = vset.pattern.permute.xlu0 1
        %376 = vperm.xlu0 %375, %v202
        %v377 = vpop.permute.xlu0 %376
        %378 = vset.pattern.permute.xlu0 1
        %379 = vperm.xlu0 %378, %v203
        %v380 = vpop.permute.xlu0 %379
        %381 = vset.pattern.permute.xlu0 1
        %382 = vperm.xlu0 %381, %v204
        %v383 = vpop.permute.xlu0 %382
        %384 = vset.pattern.permute.xlu0 1
        %385 = vperm.xlu0 %384, %v205
        %v386 = vpop.permute.xlu0 %385
        %387 = vset.pattern.permute.xlu0 1
        %388 = vperm.xlu0 %387, %v206
        %v389 = vpop.permute.xlu0 %388
        %390 = vset.pattern.permute.xlu0 1
        %391 = vperm.xlu0 %390, %v207
        %v392 = vpop.permute.xlu0 %391
        %393 = vset.pattern.permute.xlu0 1
        %394 = vperm.xlu0 %393, %v208
        %v395 = vpop.permute.xlu0 %394
        %396 = vset.pattern.permute.xlu0 1
        %397 = vperm.xlu0 %396, %v209
        %v398 = vpop.permute.xlu0 %397
        %399 = vset.pattern.permute.xlu0 1
        %400 = vperm.xlu0 %399, %v210
        %v401 = vpop.permute.xlu0 %400
        %402 = vset.pattern.permute.xlu0 1
        %403 = vperm.xlu0 %402, %v211
        %v404 = vpop.permute.xlu0 %403
        %405 = vset.pattern.permute.xlu0 1
        %406 = vperm.xlu0 %405, %v212
        %v407 = vpop.permute.xlu0 %406
        %408 = vset.pattern.permute.xlu0 1
        %409 = vperm.xlu0 %408, %v213
        %v410 = vpop.permute.xlu0 %409
        %411 = vset.pattern.permute.xlu0 1
        %412 = vperm.xlu0 %411, %v214
        %v413 = vpop.permute.xlu0 %412
        %vm414 = vcmp.eq.s32.totalorder %v368, %v252
        %vm415 = vcmp.eq.s32.totalorder %v368, %v253
        %vm416 = vcmp.eq.s32.totalorder %v371, %v252
        %vm417 = vcmp.eq.s32.totalorder %v371, %v253
        %vm418 = vcmp.eq.s32.totalorder %v374, %v252
        %vm419 = vcmp.eq.s32.totalorder %v374, %v253
        %vm420 = vcmp.eq.s32.totalorder %v377, %v252
        %vm421 = vcmp.eq.s32.totalorder %v377, %v253
        %vm422 = vcmp.eq.s32.totalorder %v380, %v252
        %vm423 = vcmp.eq.s32.totalorder %v380, %v253
        %vm424 = vcmp.eq.s32.totalorder %v383, %v252
        %vm425 = vcmp.eq.s32.totalorder %v383, %v253
        %vm426 = vcmp.eq.s32.totalorder %v386, %v252
        %vm427 = vcmp.eq.s32.totalorder %v386, %v253
        %vm428 = vcmp.eq.s32.totalorder %v389, %v252
        %vm429 = vcmp.eq.s32.totalorder %v389, %v253
        %vm430 = vcmp.eq.s32.totalorder %v392, %v252
        %vm431 = vcmp.eq.s32.totalorder %v392, %v253
        %vm432 = vcmp.eq.s32.totalorder %v395, %v252
        %vm433 = vcmp.eq.s32.totalorder %v395, %v253
        %vm434 = vcmp.eq.s32.totalorder %v398, %v252
        %vm435 = vcmp.eq.s32.totalorder %v398, %v253
        %vm436 = vcmp.eq.s32.totalorder %v401, %v252
        %vm437 = vcmp.eq.s32.totalorder %v401, %v253
        %vm438 = vcmp.eq.s32.totalorder %v404, %v252
        %vm439 = vcmp.eq.s32.totalorder %v404, %v253
        %vm440 = vcmp.eq.s32.totalorder %v407, %v252
        %vm441 = vcmp.eq.s32.totalorder %v407, %v253
        %vm442 = vcmp.eq.s32.totalorder %v410, %v252
        %vm443 = vcmp.eq.s32.totalorder %v410, %v253
        %vm444 = vcmp.eq.s32.totalorder %v413, %v252
        %vm445 = vcmp.eq.s32.totalorder %v413, %v253
        %v446 = vsel %vm414, 1, 0
        %v447 = vsel %vm415, 1, 0
        %v448 = vsel %vm416, 1, 0
        %v449 = vsel %vm417, 1, 0
        %v450 = vsel %vm418, 1, 0
        %v451 = vsel %vm419, 1, 0
        %v452 = vsel %vm420, 1, 0
        %v453 = vsel %vm421, 1, 0
        %v454 = vsel %vm422, 1, 0
        %v455 = vsel %vm423, 1, 0
        %v456 = vsel %vm424, 1, 0
        %v457 = vsel %vm425, 1, 0
        %v458 = vsel %vm426, 1, 0
        %v459 = vsel %vm427, 1, 0
        %v460 = vsel %vm428, 1, 0
        %v461 = vsel %vm429, 1, 0
        %v462 = vsel %vm430, 1, 0
        %v463 = vsel %vm431, 1, 0
        %v464 = vsel %vm432, 1, 0
        %v465 = vsel %vm433, 1, 0
        %v466 = vsel %vm434, 1, 0
        %v467 = vsel %vm435, 1, 0
        %v468 = vsel %vm436, 1, 0
        %v469 = vsel %vm437, 1, 0
        %v470 = vsel %vm438, 1, 0
        %v471 = vsel %vm439, 1, 0
        %v472 = vsel %vm440, 1, 0
        %v473 = vsel %vm441, 1, 0
        %v474 = vsel %vm442, 1, 0
        %v475 = vsel %vm443, 1, 0
        %v476 = vsel %vm444, 1, 0
        %v477 = vsel %vm445, 1, 0
        %v478 = vadd.s32 %v334, %v446
        %v479 = vadd.s32 %v335, %v447
        %v480 = vadd.s32 %v336, %v448
        %v481 = vadd.s32 %v337, %v449
        %v482 = vadd.s32 %v338, %v450
        %v483 = vadd.s32 %v339, %v451
        %v484 = vadd.s32 %v340, %v452
        %v485 = vadd.s32 %v341, %v453
        %v486 = vadd.s32 %v342, %v454
        %v487 = vadd.s32 %v343, %v455
        %v488 = vadd.s32 %v344, %v456
        %v489 = vadd.s32 %v345, %v457
        %v490 = vadd.s32 %v346, %v458
        %v491 = vadd.s32 %v347, %v459
        %v492 = vadd.s32 %v348, %v460
        %v493 = vadd.s32 %v349, %v461
        %v494 = vadd.s32 %v350, %v462
        %v495 = vadd.s32 %v351, %v463
        %v496 = vadd.s32 %v352, %v464
        %v497 = vadd.s32 %v353, %v465
        %v498 = vadd.s32 %v354, %v466
        %v499 = vadd.s32 %v355, %v467
        %v500 = vadd.s32 %v356, %v468
        %v501 = vadd.s32 %v357, %v469
        %v502 = vadd.s32 %v358, %v470
        %v503 = vadd.s32 %v359, %v471
        %v504 = vadd.s32 %v360, %v472
        %v505 = vadd.s32 %v361, %v473
        %v506 = vadd.s32 %v362, %v474
        %v507 = vadd.s32 %v363, %v475
        %v508 = vadd.s32 %v364, %v476
        %v509 = vadd.s32 %v365, %v477
        %510 = vset.pattern.permute.xlu0 2
        %511 = vperm.xlu0 %510, %v199
        %v512 = vpop.permute.xlu0 %511
        %513 = vset.pattern.permute.xlu0 2
        %514 = vperm.xlu0 %513, %v200
        %v515 = vpop.permute.xlu0 %514
        %516 = vset.pattern.permute.xlu0 2
        %517 = vperm.xlu0 %516, %v201
        %v518 = vpop.permute.xlu0 %517
        %519 = vset.pattern.permute.xlu0 2
        %520 = vperm.xlu0 %519, %v202
        %v521 = vpop.permute.xlu0 %520
        %522 = vset.pattern.permute.xlu0 2
        %523 = vperm.xlu0 %522, %v203
        %v524 = vpop.permute.xlu0 %523
        %525 = vset.pattern.permute.xlu0 2
        %526 = vperm.xlu0 %525, %v204
        %v527 = vpop.permute.xlu0 %526
        %528 = vset.pattern.permute.xlu0 2
        %529 = vperm.xlu0 %528, %v205
        %v530 = vpop.permute.xlu0 %529
        %531 = vset.pattern.permute.xlu0 2
        %532 = vperm.xlu0 %531, %v206
        %v533 = vpop.permute.xlu0 %532
        %534 = vset.pattern.permute.xlu0 2
        %535 = vperm.xlu0 %534, %v207
        %v536 = vpop.permute.xlu0 %535
        %537 = vset.pattern.permute.xlu0 2
        %538 = vperm.xlu0 %537, %v208
        %v539 = vpop.permute.xlu0 %538
        %540 = vset.pattern.permute.xlu0 2
        %541 = vperm.xlu0 %540, %v209
        %v542 = vpop.permute.xlu0 %541
        %543 = vset.pattern.permute.xlu0 2
        %544 = vperm.xlu0 %543, %v210
        %v545 = vpop.permute.xlu0 %544
        %546 = vset.pattern.permute.xlu0 2
        %547 = vperm.xlu0 %546, %v211
        %v548 = vpop.permute.xlu0 %547
        %549 = vset.pattern.permute.xlu0 2
        %550 = vperm.xlu0 %549, %v212
        %v551 = vpop.permute.xlu0 %550
        %552 = vset.pattern.permute.xlu0 2
        %553 = vperm.xlu0 %552, %v213
        %v554 = vpop.permute.xlu0 %553
        %555 = vset.pattern.permute.xlu0 2
        %556 = vperm.xlu0 %555, %v214
        %v557 = vpop.permute.xlu0 %556
        %vm558 = vcmp.eq.s32.totalorder %v512, %v252
        %vm559 = vcmp.eq.s32.totalorder %v512, %v253
        %vm560 = vcmp.eq.s32.totalorder %v515, %v252
        %vm561 = vcmp.eq.s32.totalorder %v515, %v253
        %vm562 = vcmp.eq.s32.totalorder %v518, %v252
        %vm563 = vcmp.eq.s32.totalorder %v518, %v253
        %vm564 = vcmp.eq.s32.totalorder %v521, %v252
        %vm565 = vcmp.eq.s32.totalorder %v521, %v253
        %vm566 = vcmp.eq.s32.totalorder %v524, %v252
        %vm567 = vcmp.eq.s32.totalorder %v524, %v253
        %vm568 = vcmp.eq.s32.totalorder %v527, %v252
        %vm569 = vcmp.eq.s32.totalorder %v527, %v253
        %vm570 = vcmp.eq.s32.totalorder %v530, %v252
        %vm571 = vcmp.eq.s32.totalorder %v530, %v253
        %vm572 = vcmp.eq.s32.totalorder %v533, %v252
        %vm573 = vcmp.eq.s32.totalorder %v533, %v253
        %vm574 = vcmp.eq.s32.totalorder %v536, %v252
        %vm575 = vcmp.eq.s32.totalorder %v536, %v253
        %vm576 = vcmp.eq.s32.totalorder %v539, %v252
        %vm577 = vcmp.eq.s32.totalorder %v539, %v253
        %vm578 = vcmp.eq.s32.totalorder %v542, %v252
        %vm579 = vcmp.eq.s32.totalorder %v542, %v253
        %vm580 = vcmp.eq.s32.totalorder %v545, %v252
        %vm581 = vcmp.eq.s32.totalorder %v545, %v253
        %vm582 = vcmp.eq.s32.totalorder %v548, %v252
        %vm583 = vcmp.eq.s32.totalorder %v548, %v253
        %vm584 = vcmp.eq.s32.totalorder %v551, %v252
        %vm585 = vcmp.eq.s32.totalorder %v551, %v253
        %vm586 = vcmp.eq.s32.totalorder %v554, %v252
        %vm587 = vcmp.eq.s32.totalorder %v554, %v253
        %vm588 = vcmp.eq.s32.totalorder %v557, %v252
        %vm589 = vcmp.eq.s32.totalorder %v557, %v253
        %v590 = vsel %vm558, 1, 0
        %v591 = vsel %vm559, 1, 0
        %v592 = vsel %vm560, 1, 0
        %v593 = vsel %vm561, 1, 0
        %v594 = vsel %vm562, 1, 0
        %v595 = vsel %vm563, 1, 0
        %v596 = vsel %vm564, 1, 0
        %v597 = vsel %vm565, 1, 0
        %v598 = vsel %vm566, 1, 0
        %v599 = vsel %vm567, 1, 0
        %v600 = vsel %vm568, 1, 0
        %v601 = vsel %vm569, 1, 0
        %v602 = vsel %vm570, 1, 0
        %v603 = vsel %vm571, 1, 0
        %v604 = vsel %vm572, 1, 0
        %v605 = vsel %vm573, 1, 0
        %v606 = vsel %vm574, 1, 0
        %v607 = vsel %vm575, 1, 0
        %v608 = vsel %vm576, 1, 0
        %v609 = vsel %vm577, 1, 0
        %v610 = vsel %vm578, 1, 0
        %v611 = vsel %vm579, 1, 0
        %v612 = vsel %vm580, 1, 0
        %v613 = vsel %vm581, 1, 0
        %v614 = vsel %vm582, 1, 0
        %v615 = vsel %vm583, 1, 0
        %v616 = vsel %vm584, 1, 0
        %v617 = vsel %vm585, 1, 0
        %v618 = vsel %vm586, 1, 0
        %v619 = vsel %vm587, 1, 0
        %v620 = vsel %vm588, 1, 0
        %v621 = vsel %vm589, 1, 0
        %v622 = vadd.s32 %v478, %v590
        %v623 = vadd.s32 %v479, %v591
        %v624 = vadd.s32 %v480, %v592
        %v625 = vadd.s32 %v481, %v593
        %v626 = vadd.s32 %v482, %v594
        %v627 = vadd.s32 %v483, %v595
        %v628 = vadd.s32 %v484, %v596
        %v629 = vadd.s32 %v485, %v597
        %v630 = vadd.s32 %v486, %v598
        %v631 = vadd.s32 %v487, %v599
        %v632 = vadd.s32 %v488, %v600
        %v633 = vadd.s32 %v489, %v601
        %v634 = vadd.s32 %v490, %v602
        %v635 = vadd.s32 %v491, %v603
        %v636 = vadd.s32 %v492, %v604
        %v637 = vadd.s32 %v493, %v605
        %v638 = vadd.s32 %v494, %v606
        %v639 = vadd.s32 %v495, %v607
        %v640 = vadd.s32 %v496, %v608
        %v641 = vadd.s32 %v497, %v609
        %v642 = vadd.s32 %v498, %v610
        %v643 = vadd.s32 %v499, %v611
        %v644 = vadd.s32 %v500, %v612
        %v645 = vadd.s32 %v501, %v613
        %v646 = vadd.s32 %v502, %v614
        %v647 = vadd.s32 %v503, %v615
        %v648 = vadd.s32 %v504, %v616
        %v649 = vadd.s32 %v505, %v617
        %v650 = vadd.s32 %v506, %v618
        %v651 = vadd.s32 %v507, %v619
        %v652 = vadd.s32 %v508, %v620
        %v653 = vadd.s32 %v509, %v621
        %654 = vset.pattern.permute.xlu0 3
        %655 = vperm.xlu0 %654, %v199
        %v656 = vpop.permute.xlu0 %655
        %657 = vset.pattern.permute.xlu0 3
        %658 = vperm.xlu0 %657, %v200
        %v659 = vpop.permute.xlu0 %658
        %660 = vset.pattern.permute.xlu0 3
        %661 = vperm.xlu0 %660, %v201
        %v662 = vpop.permute.xlu0 %661
        %663 = vset.pattern.permute.xlu0 3
        %664 = vperm.xlu0 %663, %v202
        %v665 = vpop.permute.xlu0 %664
        %666 = vset.pattern.permute.xlu0 3
        %667 = vperm.xlu0 %666, %v203
        %v668 = vpop.permute.xlu0 %667
        %669 = vset.pattern.permute.xlu0 3
        %670 = vperm.xlu0 %669, %v204
        %v671 = vpop.permute.xlu0 %670
        %672 = vset.pattern.permute.xlu0 3
        %673 = vperm.xlu0 %672, %v205
        %v674 = vpop.permute.xlu0 %673
        %675 = vset.pattern.permute.xlu0 3
        %676 = vperm.xlu0 %675, %v206
        %v677 = vpop.permute.xlu0 %676
        %678 = vset.pattern.permute.xlu0 3
        %679 = vperm.xlu0 %678, %v207
        %v680 = vpop.permute.xlu0 %679
        %681 = vset.pattern.permute.xlu0 3
        %682 = vperm.xlu0 %681, %v208
        %v683 = vpop.permute.xlu0 %682
        %684 = vset.pattern.permute.xlu0 3
        %685 = vperm.xlu0 %684, %v209
        %v686 = vpop.permute.xlu0 %685
        %687 = vset.pattern.permute.xlu0 3
        %688 = vperm.xlu0 %687, %v210
        %v689 = vpop.permute.xlu0 %688
        %690 = vset.pattern.permute.xlu0 3
        %691 = vperm.xlu0 %690, %v211
        %v692 = vpop.permute.xlu0 %691
        %693 = vset.pattern.permute.xlu0 3
        %694 = vperm.xlu0 %693, %v212
        %v695 = vpop.permute.xlu0 %694
        %696 = vset.pattern.permute.xlu0 3
        %697 = vperm.xlu0 %696, %v213
        %v698 = vpop.permute.xlu0 %697
        %699 = vset.pattern.permute.xlu0 3
        %700 = vperm.xlu0 %699, %v214
        %v701 = vpop.permute.xlu0 %700
        %vm702 = vcmp.eq.s32.totalorder %v656, %v252
        %vm703 = vcmp.eq.s32.totalorder %v656, %v253
        %vm704 = vcmp.eq.s32.totalorder %v659, %v252
        %vm705 = vcmp.eq.s32.totalorder %v659, %v253
        %vm706 = vcmp.eq.s32.totalorder %v662, %v252
        %vm707 = vcmp.eq.s32.totalorder %v662, %v253
        %vm708 = vcmp.eq.s32.totalorder %v665, %v252
        %vm709 = vcmp.eq.s32.totalorder %v665, %v253
        %vm710 = vcmp.eq.s32.totalorder %v668, %v252
        %vm711 = vcmp.eq.s32.totalorder %v668, %v253
        %vm712 = vcmp.eq.s32.totalorder %v671, %v252
        %vm713 = vcmp.eq.s32.totalorder %v671, %v253
        %vm714 = vcmp.eq.s32.totalorder %v674, %v252
        %vm715 = vcmp.eq.s32.totalorder %v674, %v253
        %vm716 = vcmp.eq.s32.totalorder %v677, %v252
        %vm717 = vcmp.eq.s32.totalorder %v677, %v253
        %vm718 = vcmp.eq.s32.totalorder %v680, %v252
        %vm719 = vcmp.eq.s32.totalorder %v680, %v253
        %vm720 = vcmp.eq.s32.totalorder %v683, %v252
        %vm721 = vcmp.eq.s32.totalorder %v683, %v253
        %vm722 = vcmp.eq.s32.totalorder %v686, %v252
        %vm723 = vcmp.eq.s32.totalorder %v686, %v253
        %vm724 = vcmp.eq.s32.totalorder %v689, %v252
        %vm725 = vcmp.eq.s32.totalorder %v689, %v253
        %vm726 = vcmp.eq.s32.totalorder %v692, %v252
        %vm727 = vcmp.eq.s32.totalorder %v692, %v253
        %vm728 = vcmp.eq.s32.totalorder %v695, %v252
        %vm729 = vcmp.eq.s32.totalorder %v695, %v253
        %vm730 = vcmp.eq.s32.totalorder %v698, %v252
        %vm731 = vcmp.eq.s32.totalorder %v698, %v253
        %vm732 = vcmp.eq.s32.totalorder %v701, %v252
        %vm733 = vcmp.eq.s32.totalorder %v701, %v253
        %v734 = vsel %vm702, 1, 0
        %v735 = vsel %vm703, 1, 0
        %v736 = vsel %vm704, 1, 0
        %v737 = vsel %vm705, 1, 0
        %v738 = vsel %vm706, 1, 0
        %v739 = vsel %vm707, 1, 0
        %v740 = vsel %vm708, 1, 0
        %v741 = vsel %vm709, 1, 0
        %v742 = vsel %vm710, 1, 0
        %v743 = vsel %vm711, 1, 0
        %v744 = vsel %vm712, 1, 0
        %v745 = vsel %vm713, 1, 0
        %v746 = vsel %vm714, 1, 0
        %v747 = vsel %vm715, 1, 0
        %v748 = vsel %vm716, 1, 0
        %v749 = vsel %vm717, 1, 0
        %v750 = vsel %vm718, 1, 0
        %v751 = vsel %vm719, 1, 0
        %v752 = vsel %vm720, 1, 0
        %v753 = vsel %vm721, 1, 0
        %v754 = vsel %vm722, 1, 0
        %v755 = vsel %vm723, 1, 0
        %v756 = vsel %vm724, 1, 0
        %v757 = vsel %vm725, 1, 0
        %v758 = vsel %vm726, 1, 0
        %v759 = vsel %vm727, 1, 0
        %v760 = vsel %vm728, 1, 0
        %v761 = vsel %vm729, 1, 0
        %v762 = vsel %vm730, 1, 0
        %v763 = vsel %vm731, 1, 0
        %v764 = vsel %vm732, 1, 0
        %v765 = vsel %vm733, 1, 0
        %v766 = vadd.s32 %v622, %v734
        %v767 = vadd.s32 %v623, %v735
        %v768 = vadd.s32 %v624, %v736
        %v769 = vadd.s32 %v625, %v737
        %v770 = vadd.s32 %v626, %v738
        %v771 = vadd.s32 %v627, %v739
        %v772 = vadd.s32 %v628, %v740
        %v773 = vadd.s32 %v629, %v741
        %v774 = vadd.s32 %v630, %v742
        %v775 = vadd.s32 %v631, %v743
        %v776 = vadd.s32 %v632, %v744
        %v777 = vadd.s32 %v633, %v745
        %v778 = vadd.s32 %v634, %v746
        %v779 = vadd.s32 %v635, %v747
        %v780 = vadd.s32 %v636, %v748
        %v781 = vadd.s32 %v637, %v749
        %v782 = vadd.s32 %v638, %v750
        %v783 = vadd.s32 %v639, %v751
        %v784 = vadd.s32 %v640, %v752
        %v785 = vadd.s32 %v641, %v753
        %v786 = vadd.s32 %v642, %v754
        %v787 = vadd.s32 %v643, %v755
        %v788 = vadd.s32 %v644, %v756
        %v789 = vadd.s32 %v645, %v757
        %v790 = vadd.s32 %v646, %v758
        %v791 = vadd.s32 %v647, %v759
        %v792 = vadd.s32 %v648, %v760
        %v793 = vadd.s32 %v649, %v761
        %v794 = vadd.s32 %v650, %v762
        %v795 = vadd.s32 %v651, %v763
        %v796 = vadd.s32 %v652, %v764
        %v797 = vadd.s32 %v653, %v765
        %v798 = vld [vmem:[#allocation2] sm:$0xff]
        %v799 = vld [vmem:[#allocation2 + $0x8] sm:$0xff]
        %v800 = vld [vmem:[#allocation2 + $0x10] sm:$0xff]
        %v801 = vld [vmem:[#allocation2 + $0x18] sm:$0xff]
        %v802 = vld [vmem:[#allocation2 + $0x20] sm:$0xff]
        %v803 = vld [vmem:[#allocation2 + $0x28] sm:$0xff]
        %v804 = vld [vmem:[#allocation2 + $0x30] sm:$0xff]
        %v805 = vld [vmem:[#allocation2 + $0x38] sm:$0xff]
        %v806 = vld [vmem:[#allocation2 + $0x40] sm:$0xff]
        %v807 = vld [vmem:[#allocation2 + $0x48] sm:$0xff]
        %v808 = vld [vmem:[#allocation2 + $0x50] sm:$0xff]
        %v809 = vld [vmem:[#allocation2 + $0x58] sm:$0xff]
        %v810 = vld [vmem:[#allocation2 + $0x60] sm:$0xff]
        %v811 = vld [vmem:[#allocation2 + $0x68] sm:$0xff]
        %v812 = vld [vmem:[#allocation2 + $0x70] sm:$0xff]
        %v813 = vld [vmem:[#allocation2 + $0x78] sm:$0xff]
        %v814 = vcvt.s32.f32 %v766
        %v815 = vcvt.s32.f32 %v767
        %v816 = vcvt.s32.f32 %v768
        %v817 = vcvt.s32.f32 %v769
        %v818 = vcvt.s32.f32 %v770
        %v819 = vcvt.s32.f32 %v771
        %v820 = vcvt.s32.f32 %v772
        %v821 = vcvt.s32.f32 %v773
        %v822 = vcvt.s32.f32 %v774
        %v823 = vcvt.s32.f32 %v775
        %v824 = vcvt.s32.f32 %v776
        %v825 = vcvt.s32.f32 %v777
        %v826 = vcvt.s32.f32 %v778
        %v827 = vcvt.s32.f32 %v779
        %v828 = vcvt.s32.f32 %v780
        %v829 = vcvt.s32.f32 %v781
        %v830 = vcvt.s32.f32 %v782
        %v831 = vcvt.s32.f32 %v783
        %v832 = vcvt.s32.f32 %v784
        %v833 = vcvt.s32.f32 %v785
        %v834 = vcvt.s32.f32 %v786
        %v835 = vcvt.s32.f32 %v787
        %v836 = vcvt.s32.f32 %v788
        %v837 = vcvt.s32.f32 %v789
        %v838 = vcvt.s32.f32 %v790
        %v839 = vcvt.s32.f32 %v791
        %v840 = vcvt.s32.f32 %v792
        %v841 = vcvt.s32.f32 %v793
        %v842 = vcvt.s32.f32 %v794
        %v843 = vcvt.s32.f32 %v795
        %v844 = vcvt.s32.f32 %v796
        %v845 = vcvt.s32.f32 %v797
        %846 = vmatprep.subr.mxu0 0.0
        %847 = vmatpush1.msra.mxu0 %v215
        %848 = vmatprep.subr.mxu0 0.0
        %849 = vmatpush1.msra.mxu0 %v216
        %850 = vmatprep.subr.mxu0 0.0
        %851 = vmatpush1.msra.mxu0 %v217
        %852 = vmatprep.subr.mxu0 0.0
        %853 = vmatpush1.msra.mxu0 %v218
        %854 = vmatprep.subr.mxu0 0.0
        %855 = vmatpush1.msra.mxu0 %v219
        %856 = vmatprep.subr.mxu0 0.0
        %857 = vmatpush1.msra.mxu0 %v220
        %858 = vmatprep.subr.mxu0 0.0
        %859 = vmatpush1.msra.mxu0 %v221
        %860 = vmatprep.subr.mxu0 0.0
        %861 = vmatpush1.msra.mxu0 %v222
        %862 = vmatprep.subr.mxu0 0.0
        %863 = vmatpush1.msra.mxu0 %v223
        %864 = vmatprep.subr.mxu0 0.0
        %865 = vmatpush1.msra.mxu0 %v224
        %866 = vmatprep.subr.mxu0 0.0
        %867 = vmatpush1.msra.mxu0 %v225
        %868 = vmatprep.subr.mxu0 0.0
        %869 = vmatpush1.msra.mxu0 %v226
        %870 = vmatprep.subr.mxu0 0.0
        %871 = vmatpush1.msra.mxu0 %v227
        %872 = vmatprep.subr.mxu0 0.0
        %873 = vmatpush1.msra.mxu0 %v228
        %874 = vmatprep.subr.mxu0 0.0
        %875 = vmatpush1.msra.mxu0 %v229
        %876 = vmatprep.subr.mxu0 0.0
        %877 = vmatpush1.msra.mxu0 %v230
        %878 = vmatprep.subr.mxu0 0.0
        %879 = vmatpush1.msra.mxu0 %v231
        %880 = vmatprep.subr.mxu0 0.0
        %881 = vmatpush1.msra.mxu0 %v232
        %882 = vmatprep.subr.mxu0 0.0
        %883 = vmatpush1.msra.mxu0 %v233
        %884 = vmatprep.subr.mxu0 0.0
        %885 = vmatpush1.msra.mxu0 %v234
        %886 = vmatprep.subr.mxu0 0.0
        %887 = vmatpush1.msra.mxu0 %v235
        %888 = vmatprep.subr.mxu0 0.0
        %889 = vmatpush1.msra.mxu0 %v236
        %890 = vmatprep.subr.mxu0 0.0
        %891 = vmatpush1.msra.mxu0 %v237
        %892 = vmatprep.subr.mxu0 0.0
        %893 = vmatpush1.msra.mxu0 %v238
        %894 = vmatprep.subr.mxu0 0.0
        %895 = vmatpush1.msra.mxu0 %v239
        %896 = vmatprep.subr.mxu0 0.0
        %897 = vmatpush1.msra.mxu0 %v240
        %898 = vmatprep.subr.mxu0 0.0
        %899 = vmatpush1.msra.mxu0 %v241
        %900 = vmatprep.subr.mxu0 0.0
        %901 = vmatpush1.msra.mxu0 %v242
        %902 = vmatprep.subr.mxu0 0.0
        %903 = vmatpush1.msra.mxu0 %v243
        %904 = vmatprep.subr.mxu0 0.0
        %905 = vmatpush1.msra.mxu0 %v244
        %906 = vmatprep.subr.mxu0 0.0
        %907 = vmatpush1.msra.mxu0 %v245
        %908 = vmatprep.subr.mxu0 0.0
        %909 = vmatpush1.msra.mxu0 %v246
        %910 = vmatprep.mubr.f32.mxu0 %v815
        %911 = vmatmul.mubr.f32.gmra.mrb[0].mxu0 %v814
        %v912 = vpop.f32.mrb[0].mxu0
        %v913 = vadd.f32 0.0, %v912
        %v914 = vpop.f32.mrb[0].mxu0
        %915 = vmatprep.mubr.f32.mxu0 %v817
        %916 = vmatmul.mubr.f32.gmra.mrb[0].mxu0 %v816
        %v917 = vpop.f32.mrb[0].mxu0
        %v918 = vadd.f32 0.0, %v917
        %v919 = vpop.f32.mrb[0].mxu0
        %920 = vmatprep.mubr.f32.mxu0 %v819
        %921 = vmatmul.mubr.f32.gmra.mrb[0].mxu0 %v818
        %v922 = vpop.f32.mrb[0].mxu0
        %v923 = vadd.f32 0.0, %v922
        %v924 = vpop.f32.mrb[0].mxu0
        %925 = vmatprep.mubr.f32.mxu0 %v821
        %926 = vmatmul.mubr.f32.gmra.mrb[0].mxu0 %v820
        %v927 = vpop.f32.mrb[0].mxu0
        %v928 = vadd.f32 0.0, %v927
        %v929 = vpop.f32.mrb[0].mxu0
        %930 = vmatprep.mubr.f32.mxu0 %v823
        %931 = vmatmul.mubr.f32.gmra.mrb[0].mxu0 %v822
        %v932 = vpop.f32.mrb[0].mxu0
        %v933 = vadd.f32 0.0, %v932
        %v934 = vpop.f32.mrb[0].mxu0
        %935 = vmatprep.mubr.f32.mxu0 %v825
        %936 = vmatmul.mubr.f32.gmra.mrb[0].mxu0 %v824
        %v937 = vpop.f32.mrb[0].mxu0
        %v938 = vadd.f32 0.0, %v937
        %v939 = vpop.f32.mrb[0].mxu0
        %940 = vmatprep.mubr.f32.mxu0 %v827
        %941 = vmatmul.mubr.f32.gmra.mrb[0].mxu0 %v826
        %v942 = vpop.f32.mrb[0].mxu0
        %v943 = vadd.f32 0.0, %v942
        %v944 = vpop.f32.mrb[0].mxu0
        %945 = vmatprep.mubr.f32.mxu0 %v829
        %946 = vmatmul.mubr.f32.gmra.mrb[0].mxu0 %v828
        %v947 = vpop.f32.mrb[0].mxu0
        %v948 = vadd.f32 0.0, %v947
        %v949 = vpop.f32.mrb[0].mxu0
        %950 = vmatprep.mubr.f32.mxu0 %v831
        %951 = vmatmul.mubr.f32.gmra.mrb[0].mxu0 %v830
        %v952 = vpop.f32.mrb[0].mxu0
        %v953 = vadd.f32 0.0, %v952
        %v954 = vpop.f32.mrb[0].mxu0
        %955 = vmatprep.mubr.f32.mxu0 %v833
        %956 = vmatmul.mubr.f32.gmra.mrb[0].mxu0 %v832
        %v957 = vpop.f32.mrb[0].mxu0
        %v958 = vadd.f32 0.0, %v957
        %v959 = vpop.f32.mrb[0].mxu0
        %960 = vmatprep.mubr.f32.mxu0 %v835
        %961 = vmatmul.mubr.f32.gmra.mrb[0].mxu0 %v834
        %v962 = vpop.f32.mrb[0].mxu0
        %v963 = vadd.f32 0.0, %v962
        %v964 = vpop.f32.mrb[0].mxu0
        %965 = vmatprep.mubr.f32.mxu0 %v837
        %966 = vmatmul.mubr.f32.gmra.mrb[0].mxu0 %v836
        %v967 = vpop.f32.mrb[0].mxu0
        %v968 = vadd.f32 0.0, %v967
        %v969 = vpop.f32.mrb[0].mxu0
        %970 = vmatprep.mubr.f32.mxu0 %v839
        %971 = vmatmul.mubr.f32.gmra.mrb[0].mxu0 %v838
        %v972 = vpop.f32.mrb[0].mxu0
        %v973 = vadd.f32 0.0, %v972
        %v974 = vpop.f32.mrb[0].mxu0
        %975 = vmatprep.mubr.f32.mxu0 %v841
        %976 = vmatmul.mubr.f32.gmra.mrb[0].mxu0 %v840
        %v977 = vpop.f32.mrb[0].mxu0
        %v978 = vadd.f32 0.0, %v977
        %v979 = vpop.f32.mrb[0].mxu0
        %980 = vmatprep.mubr.f32.mxu0 %v843
        %981 = vmatmul.mubr.f32.gmra.mrb[0].mxu0 %v842
        %v982 = vpop.f32.mrb[0].mxu0
        %v983 = vadd.f32 0.0, %v982
        %v984 = vpop.f32.mrb[0].mxu0
        %985 = vmatprep.mubr.f32.mxu0 %v845
        %986 = vmatmul.mubr.f32.gmra.mrb[0].mxu0 %v844
        %v987 = vpop.f32.mrb[0].mxu0
        %v988 = vadd.f32 0.0, %v987
        %v989 = vpop.f32.mrb[0].mxu0
        %990 = vdwg.mxu0
        %v991 = vadd.f32 %v798, %v913
        %v992 = vadd.f32 %v799, %v918
        %v993 = vadd.f32 %v800, %v923
        %v994 = vadd.f32 %v801, %v928
        %v995 = vadd.f32 %v802, %v933
        %v996 = vadd.f32 %v803, %v938
        %v997 = vadd.f32 %v804, %v943
        %v998 = vadd.f32 %v805, %v948
        %v999 = vadd.f32 %v806, %v953
        %v1000 = vadd.f32 %v807, %v958
        %v1001 = vadd.f32 %v808, %v963
        %v1002 = vadd.f32 %v809, %v968
        %v1003 = vadd.f32 %v810, %v973
        %v1004 = vadd.f32 %v811, %v978
        %v1005 = vadd.f32 %v812, %v983
        %v1006 = vadd.f32 %v813, %v988
        %1007 = vst [vmem:[#allocation2] sm:$0xff] %v991
        %1008 = vst [vmem:[#allocation2 + $0x8] sm:$0xff] %v992
        %1009 = vst [vmem:[#allocation2 + $0x10] sm:$0xff] %v993
        %1010 = vst [vmem:[#allocation2 + $0x18] sm:$0xff] %v994
        %1011 = vst [vmem:[#allocation2 + $0x20] sm:$0xff] %v995
        %1012 = vst [vmem:[#allocation2 + $0x28] sm:$0xff] %v996
        %1013 = vst [vmem:[#allocation2 + $0x30] sm:$0xff] %v997
        %1014 = vst [vmem:[#allocation2 + $0x38] sm:$0xff] %v998
        %1015 = vst [vmem:[#allocation2 + $0x40] sm:$0xff] %v999
        %1016 = vst [vmem:[#allocation2 + $0x48] sm:$0xff] %v1000
        %1017 = vst [vmem:[#allocation2 + $0x50] sm:$0xff] %v1001
        %1018 = vst [vmem:[#allocation2 + $0x58] sm:$0xff] %v1002
        %1019 = vst [vmem:[#allocation2 + $0x60] sm:$0xff] %v1003
        %1020 = vst [vmem:[#allocation2 + $0x68] sm:$0xff] %v1004
        %1021 = vst [vmem:[#allocation2 + $0x70] sm:$0xff] %v1005
        %1022 = vst [vmem:[#allocation2 + $0x78] sm:$0xff] %v1006
        // Predicated region
        $region33: #{tpu_custom_call.1} parent=27 // pred_check
          %p1023 = pneg %p179
        $region34: #{tpu_custom_call.1} parent=27 // pred_check_branch
          %1025 = sbr.rel (%p1023) target = $region36
        $region35: #{tpu_custom_call.1} parent=27 // pred_region
          %v1026 = vld [vmem:[#allocation2] sm:$0xff]
          %v1027 = vld [vmem:[#allocation2 + $0x8] sm:$0xff]
          %v1028 = vld [vmem:[#allocation2 + $0x10] sm:$0xff]
          %v1029 = vld [vmem:[#allocation2 + $0x18] sm:$0xff]
          %v1030 = vld [vmem:[#allocation2 + $0x20] sm:$0xff]
          %v1031 = vld [vmem:[#allocation2 + $0x28] sm:$0xff]
          %v1032 = vld [vmem:[#allocation2 + $0x30] sm:$0xff]
          %v1033 = vld [vmem:[#allocation2 + $0x38] sm:$0xff]
          %v1034 = vld [vmem:[#allocation2 + $0x40] sm:$0xff]
          %v1035 = vld [vmem:[#allocation2 + $0x48] sm:$0xff]
          %v1036 = vld [vmem:[#allocation2 + $0x50] sm:$0xff]
          %v1037 = vld [vmem:[#allocation2 + $0x58] sm:$0xff]
          %v1038 = vld [vmem:[#allocation2 + $0x60] sm:$0xff]
          %v1039 = vld [vmem:[#allocation2 + $0x68] sm:$0xff]
          %v1040 = vld [vmem:[#allocation2 + $0x70] sm:$0xff]
          %v1041 = vld [vmem:[#allocation2 + $0x78] sm:$0xff]
          %v1042 = vmul.f32 %v1026, 0.25
          %v1043 = vmul.f32 %v1027, 0.25
          %v1044 = vmul.f32 %v1028, 0.25
          %v1045 = vmul.f32 %v1029, 0.25
          %v1046 = vmul.f32 %v1030, 0.25
          %v1047 = vmul.f32 %v1031, 0.25
          %v1048 = vmul.f32 %v1032, 0.25
          %v1049 = vmul.f32 %v1033, 0.25
          %v1050 = vmul.f32 %v1034, 0.25
          %v1051 = vmul.f32 %v1035, 0.25
          %v1052 = vmul.f32 %v1036, 0.25
          %v1053 = vmul.f32 %v1037, 0.25
          %v1054 = vmul.f32 %v1038, 0.25
          %v1055 = vmul.f32 %v1039, 0.25
          %v1056 = vmul.f32 %v1040, 0.25
          %v1057 = vmul.f32 %v1041, 0.25
          %1058 = vst [vmem:[%s165] sm:$0xff] %v1042
          %1059 = vst [vmem:[%s165 + $0x8] sm:$0xff] %v1043
          %1060 = vst [vmem:[%s165 + $0x10] sm:$0xff] %v1044
          %1061 = vst [vmem:[%s165 + $0x18] sm:$0xff] %v1045
          %1062 = vst [vmem:[%s165 + $0x20] sm:$0xff] %v1046
          %1063 = vst [vmem:[%s165 + $0x28] sm:$0xff] %v1047
          %1064 = vst [vmem:[%s165 + $0x30] sm:$0xff] %v1048
          %1065 = vst [vmem:[%s165 + $0x38] sm:$0xff] %v1049
          %1066 = vst [vmem:[%s165 + $0x40] sm:$0xff] %v1050
          %1067 = vst [vmem:[%s165 + $0x48] sm:$0xff] %v1051
          %1068 = vst [vmem:[%s165 + $0x50] sm:$0xff] %v1052
          %1069 = vst [vmem:[%s165 + $0x58] sm:$0xff] %v1053
          %1070 = vst [vmem:[%s165 + $0x60] sm:$0xff] %v1054
          %1071 = vst [vmem:[%s165 + $0x68] sm:$0xff] %v1055
          %1072 = vst [vmem:[%s165 + $0x70] sm:$0xff] %v1056
          %1073 = vst [vmem:[%s165 + $0x78] sm:$0xff] %v1057
        $region36: #{tpu_custom_call.1} parent=27 // pred_fallthru
          _
        %s1074 = sand.u32 %s88, 1
        %s1075 = scalar_lea.sflag [#allocation4], %s1074
        %s1076 = sand.u32 %s88, 1
        %s1077 = smul.addr %s1076, 128
        %s1078 = scalar_lea.vmem [#allocation3], %s1077
        // Predicated region
        $region37: #{tpu_custom_call.1} parent=27 // pred_check
          %p1079 = pneg %p98
        $region38: #{tpu_custom_call.1} parent=27 // pred_check_branch
          %1081 = sbr.rel (%p1079) target = $region40
        $region39: #{tpu_custom_call.1} parent=27 // pred_region
          %s1082 = smul.u32 16, %s20
          %s1084 = ssub.s32 2048, 2048
          %1085 = vsyncadd %s1075, %s1084
          %s1086 = smul.addr %s1082, 128
          %s1087 = scalar_lea.hbm %s2, %s1086
          %s1088 = sshll.u32 %s1078, 4
          %s1089 = int_to_ptr.vmem [resolvable:$true] %s1088
          %1094 = dma.vmem_to_hbm [thread:$0]  %s1089, 2048, %s1087, %s1075, 128, 128, 8
        $region40: #{tpu_custom_call.1} parent=27 // pred_fallthru
          _
      $region28: #{tpu_custom_call.1} parent=5 // pred_fallthru
        _
      %p1095 = scmp.le.s32.totalorder 2, %s11
      // Predicated region
      $region41: #{tpu_custom_call.1} parent=5 // pred_check
        %p1096 = pneg %p1095
      $region42: #{tpu_custom_call.1} parent=5 // pred_check_branch
        %1098 = sbr.rel (%p1096) target = $region44
      $region43: #{tpu_custom_call.1} parent=5 // pred_region
        %s1099 = ssub.s32 %s11, 2
        // Predicated region
        $region45: #{tpu_custom_call.1} parent=43 // pred_check
          %p1100 = pneg %p104
        $region46: #{tpu_custom_call.1} parent=43 // pred_check_branch
          %1102 = sbr.rel (%p1100) target = $region48
        $region47: #{tpu_custom_call.1} parent=43 // pred_region
          %s1103 = sand.u32 %s89, 1
          %s1104 = scalar_lea.sflag [#allocation4], %s1103
          %s1105 = sand.u32 %s89, 1
          %s1106 = smul.addr %s1105, 128
          %s1107 = scalar_lea.vmem [#allocation3], %s1106
          %1108 = dma.done %s1104, 2048
        $region48: #{tpu_custom_call.1} parent=43 // pred_fallthru
          _
      $region44: #{tpu_custom_call.1} parent=5 // pred_fallthru
        _
    $region6: #{tpu_custom_call.1} parent=1 // loop_footer
      %s15 = sadd.s32 1, %s11
    $region7: #{tpu_custom_call.1} parent=1 // loop_footer_branch
      %10 = sbr.rel target = $region3
    $region8: #{tpu_custom_call.1} parent=1 // loop_exit
      _
    %1109 = vsyncpa [#allocation4], 1
    %s1110 = scalar_lea.sflag [#allocation4], 1
    %1111 = vsyncpa %s1110, 1

</llo_original>
